<compile_context>
chip_gen: v6e
topology: v6e:2x2x1
jax: 0.10.0
libtpu: 0.0.40
codegen_flags: <defaults>
</compile_context>

<pallas_src>
import functools

import jax
import jax.numpy as jnp
from jax import lax
from jax.experimental import pallas as pl
from jax.experimental.pallas import tpu as pltpu

# ---- static hyperparameters (stand-in for `opt`) ----
TEMPERATURE = 0.05
LABEL_SMOOTHING = 0.1
ALPHA = 0.8          # hard-coded in forward()
MARGIN = 2.0         # hard-coded in forward()
NORM_QUERY = True
NORM_DOC = True

STATS_LANES = 128
# stats lane layout: [loss, p_loss, wp_loss, rank_loss, accuracy, stdq, stdp, stdwq]


# ---------------------------------------------------------------------------
# Fused kernel: encoders (at first queue tile) + online queue-tiled loss.
# ---------------------------------------------------------------------------
def _fused_kernel(tok_ref, wgt_ref, emb_ref, wq_ref, bq_ref, wk_ref, bk_ref,
                  queue_ref, stats_ref,
                  lhs_ref, p_ref,
                  m_p_ref, s_p_ref, sum_p_ref,
                  m_w_ref, s_w_ref, sum_w_ref,
                  m_bl_ref, hinge_ref,
                  *, B, S, K):
    k_idx = pl.program_id(0)
    nk = pl.num_programs(0)
    inv_t = 1.0 / TEMPERATURE
    ls = LABEL_SMOOTHING
    C = float(K + 1)

    # ---- phase 0 (first queue tile): encoders + accumulator init ----------
    @pl.when(k_idx == 0)
    def _():
        R = tok_ref.shape[0]          # 3*B*S stacked token rows (q, wq, p)
        V = emb_ref.shape[0]
        G = 3 * B

        # Embedding lookup as a one-hot MXU matmul (fine for small vocab).
        # TODO(synk): for large vocabularies replace with a scalar-prefetch /
        # manual-DMA row gather from an HBM-resident embedding table.
        tok = tok_ref[...]                                          # (R, 1)
        onehot = (lax.broadcasted_iota(jnp.int32, (R, V), 1) == tok
                  ).astype(jnp.float32)
        x = jnp.dot(onehot, emb_ref[...],
                    preferred_element_type=jnp.float32)             # (R, D)

        # Masked mean pooling as a matmul: row g of pool_w selects token rows
        # [g*S, (g+1)*S) scaled by mask/denom (denom folded in by the wrapper).
        row = lax.broadcasted_iota(jnp.int32, (G, R), 0)
        col = lax.broadcasted_iota(jnp.int32, (G, R), 1)
        sel = jnp.logical_and(col >= row * S, col < row * S + S)
        pool_w = sel.astype(jnp.float32) * wgt_ref[...]             # (G, R)
        pooled = jnp.dot(pool_w, x,
                         preferred_element_type=jnp.float32)        # (G, D)

        # Projection heads: encoder_q on rows [0, 2B), encoder_k on [2B, 3B).
        h_q = jnp.dot(pooled[0:2 * B, :], wq_ref[...],
                      preferred_element_type=jnp.float32) + bq_ref[...]
        h_p = jnp.dot(pooled[2 * B:3 * B, :], wk_ref[...],
                      preferred_element_type=jnp.float32) + bk_ref[...]

        def l2norm(v):   # x / max(||x||, 1e-12) via EUP rsqrt
            ssq = jnp.sum(v * v, axis=-1, keepdims=True)
            return v * lax.rsqrt(jnp.maximum(ssq, 1e-24))

        q = h_q[0:B, :]
        wq = h_q[B:2 * B, :]
        p = h_p
        if NORM_QUERY:
            q = l2norm(q)
            wq = l2norm(wq)
        if NORM_DOC:
            p = l2norm(p)

        # Stacked LHS for the single wide queue matmul:
        #   [ q ; wq ; alpha*q + (1-alpha)*wq ; wq - q ]
        lhs_ref[pl.ds(0, B), :] = q
        lhs_ref[pl.ds(B, B), :] = wq
        lhs_ref[pl.ds(2 * B, B), :] = ALPHA * q + (1.0 - ALPHA) * wq
        lhs_ref[pl.ds(3 * B, B), :] = wq - q
        p_ref[...] = p

        neg_inf = jnp.full((B, 1), -jnp.inf, dtype=jnp.float32)
        zeros = jnp.zeros((B, 1), dtype=jnp.float32)
        m_p_ref[...] = neg_inf
        m_w_ref[...] = neg_inf
        m_bl_ref[...] = neg_inf
        s_p_ref[...] = zeros
        s_w_ref[...] = zeros
        sum_p_ref[...] = zeros
        sum_w_ref[...] = zeros
        hinge_ref[...] = zeros

    # ---- every queue tile: one wide MXU matmul + online accumulators ------
    queue_t = queue_ref[...]                                        # (D, TK)
    lhs = lhs_ref[...]
    if queue_t.dtype != jnp.float32:                 # bf16 queue support
        lhs = lhs.astype(queue_t.dtype)
    s_all = jnp.dot(lhs, queue_t,
                    preferred_element_type=jnp.float32) * inv_t     # (4B, TK)
    l_neg_p = s_all[0:B, :]            # q  . queue / T
    l_neg_w = s_all[B:2 * B, :]        # wq . queue / T
    l_neg_bl = s_all[2 * B:3 * B, :]   # blended negative logits
    neg_diff = s_all[3 * B:4 * B, :]   # wl_neg - pl_neg

    def online_update(m_ref, s_ref, sum_ref, l_neg):
        tile_max = jnp.max(l_neg, axis=-1, keepdims=True)
        m_new = jnp.maximum(m_ref[...], tile_max)
        s_ref[...] = (s_ref[...] * jnp.exp(m_ref[...] - m_new)
                      + jnp.sum(jnp.exp(l_neg - m_new), axis=-1, keepdims=True))
        m_ref[...] = m_new
        sum_ref[...] += jnp.sum(l_neg, axis=-1, keepdims=True)

    online_update(m_p_ref, s_p_ref, sum_p_ref, l_neg_p)
    online_update(m_w_ref, s_w_ref, sum_w_ref, l_neg_w)
    m_bl_ref[...] = jnp.maximum(m_bl_ref[...],
                                jnp.max(l_neg_bl, axis=-1, keepdims=True))
    hinge_ref[...] += jnp.sum(jnp.maximum(0.0, neg_diff + MARGIN),
                              axis=-1, keepdims=True)

    # ---- last tile: positives, losses, accuracy, std stats ----------------
    @pl.when(k_idx == nk - 1)
    def _():
        q = lhs_ref[pl.ds(0, B), :]
        wq = lhs_ref[pl.ds(B, B), :]
        p = p_ref[...]
        l_pos_p = jnp.sum(q * p, axis=-1, keepdims=True) * inv_t     # (B, 1)
        l_pos_w = jnp.sum(wq * p, axis=-1, keepdims=True) * inv_t

        def ce_and_correct(l_pos, m_neg, s_neg, sum_neg):
            m_full = jnp.maximum(l_pos, m_neg)
            sumexp = jnp.exp(l_pos - m_full) + s_neg * jnp.exp(m_neg - m_full)
            lse = m_full + jnp.log(sumexp)
            logp0 = l_pos - lse
            # sum_j log p_j = (l_pos + sum(l_neg)) - (K+1)*lse
            sum_logp = logp0 + (sum_neg - float(K) * lse)
            ce = (1.0 - ls) * (-logp0) + ls * (-sum_logp / C)
            correct = (l_pos >= m_neg).astype(jnp.float32)
            return jnp.mean(ce), correct

        p_loss, correct_p = ce_and_correct(l_pos_p, m_p_ref[...],
                                           s_p_ref[...], sum_p_ref[...])
        wp_loss, correct_w = ce_and_correct(l_pos_w, m_w_ref[...],
                                            s_w_ref[...], sum_w_ref[...])

        # rows correct under both p_logits and wp_logits (the "intersection")
        both = correct_p * correct_w
        n_sel = jnp.sum(both)

        # margin ranking loss: mean over (B, K+1) of max(0, -(p - wp) + margin)
        hinge_pos = jnp.maximum(0.0, -(l_pos_p - l_pos_w) + MARGIN)  # (B, 1)
        row_sum = hinge_pos + hinge_ref[...]                         # (B, 1)
        rank_all = jnp.sum(row_sum) / (B * C)
        rank_sel = jnp.sum(row_sum * both) / jnp.maximum(n_sel * C, 1.0)
        rank_loss = jnp.where(n_sel > 0.0, rank_sel, rank_all)

        loss = ALPHA * p_loss + (1.0 - ALPHA) * wp_loss + rank_loss

        # blended logits -> accuracy (argmax == 0), neg max from the blend row
        bl_pos = ALPHA * l_pos_p + (1.0 - ALPHA) * l_pos_w
        pred_ok = (bl_pos >= m_bl_ref[...]).astype(jnp.float32)
        accuracy = 100.0 * jnp.mean(pred_ok)

        def std_mean(v):   # torch.std(dim=0) is ddof=1, then .mean()
            mu = jnp.mean(v, axis=0, keepdims=True)
            var = jnp.sum((v - mu) * (v - mu), axis=0, keepdims=True) / (B - 1)
            return jnp.mean(jnp.sqrt(var))

        stdq = std_mean(q)
        stdp = std_mean(p)
        stdwq = std_mean(wq)

        # single lane-dense (1, 128) store of all logged scalars
        lane = lax.broadcasted_iota(jnp.int32, (1, STATS_LANES), 1)
        vals = (loss, p_loss, wp_loss, rank_loss, accuracy, stdq, stdp, stdwq)
        vec = jnp.zeros((1, STATS_LANES), dtype=jnp.float32)
        for i, v in enumerate(vals):
            vec = vec + (lane == i).astype(jnp.float32) * v
        stats_ref[...] = vec


def _pick_queue_tile(K):
    # multiples of 128 keep the MXU lane-aligned on all generations (use 256+
    # on v6e/v7x); prefer >=2 tiles so the online-accumulator path is exercised
    for t in (2048, 1024, 512, 256, 128):
        if K % t == 0 and K // t >= 2:
            return t
    return K


def _fused_forward(tok_flat, pool_weights, emb, Wq, bq, Wk, bk, queue, *, B, S):
    V, D = emb.shape
    K = queue.shape[1]
    tile_k = _pick_queue_tile(K)
    assert K % tile_k == 0
    nk = K // tile_k
    R = tok_flat.shape[0]

    kernel = functools.partial(_fused_kernel, B=B, S=S, K=K)

    grid_spec = pltpu.PrefetchScalarGridSpec(
        num_scalar_prefetch=0,
        grid=(nk,),
        in_specs=[
            pl.BlockSpec((R, 1), lambda k: (0, 0)),       # token ids
            pl.BlockSpec((1, R), lambda k: (0, 0)),       # pooling weights
            pl.BlockSpec((V, D), lambda k: (0, 0)),       # embedding table
            pl.BlockSpec((D, D), lambda k: (0, 0)),       # Wq
            pl.BlockSpec((1, D), lambda k: (0, 0)),       # bq
            pl.BlockSpec((D, D), lambda k: (0, 0)),       # Wk
            pl.BlockSpec((1, D), lambda k: (0, 0)),       # bk
            pl.BlockSpec((D, tile_k), lambda k: (0, k)),  # queue tile along K
        ],
        out_specs=pl.BlockSpec((1, STATS_LANES), lambda k: (0, 0)),
        scratch_shapes=(
            [pltpu.VMEM((4 * B, D), jnp.float32),   # stacked LHS [q;wq;blend;diff]
             pltpu.VMEM((B, D), jnp.float32)]       # p (keys)
            + [pltpu.VMEM((B, 1), jnp.float32)] * 8  # online accumulators
        ),
    )
    return pl.pallas_call(
        kernel,
        out_shape=jax.ShapeDtypeStruct((1, STATS_LANES), jnp.float32),
        grid_spec=grid_spec,
        compiler_params=pltpu.CompilerParams(
            dimension_semantics=("arbitrary",),         # K axis is a reduction
            vmem_limit_bytes=32 * 1024 * 1024),
    )(tok_flat, pool_weights, emb, Wq, bq, Wk, bk, queue)


# ---------------------------------------------------------------------------
# Forward wrapper (mirrors TimeMoCoQ1.forward, eval path / stats_prefix='')
# ---------------------------------------------------------------------------
def time_moco_q1_forward(params, q_tokens, q_mask, k_tokens, k_mask,
                         stats_prefix='', iter_stats=None, **kwargs):
    if iter_stats is None:
        iter_stats = {}
    bsz, S = q_tokens.shape

    # Stack q / wp / p inputs so all three encoder passes run in one kernel.
    tokens = jnp.stack([q_tokens, kwargs['wp_tokens'], kwargs['p_tokens']],
                       axis=0)
    masks = jnp.stack([q_mask, kwargs['wp_mask'], kwargs['p_mask']],
                      axis=0).astype(jnp.float32)
    # fold 1/denom into the mask -> pooling weights; clamp denom (all-pad rows)
    denom = jnp.maximum(jnp.sum(masks, axis=-1, keepdims=True), 1e-6)
    pool_weights = (masks / denom).reshape(1, 3 * bsz * S)
    tok_flat = tokens.reshape(3 * bsz * S, 1).astype(jnp.int32)

    stats = _fused_forward(tok_flat, pool_weights, params['emb'],
                           params['Wq'], params['bq'],
                           params['Wk'], params['bk'],
                           params['p_queue'], B=bsz, S=S)

    # single device->host transfer for all logged scalars
    host = jax.device_get(stats)[0]
    prefix = stats_prefix + '/' if len(stats_prefix) > 0 else ''
    iter_stats[f'{prefix}p_loss'] = (float(host[1]), bsz)
    iter_stats[f'{prefix}wp_loss'] = (float(host[2]), bsz)
    iter_stats[f'{prefix}rank_loss'] = (float(host[3]), bsz)
    iter_stats[f'{prefix}all_loss'] = (float(host[0]), bsz)
    iter_stats[f'{prefix}accuracy'] = (float(host[4]), bsz)
    iter_stats[f'{prefix}stdq'] = (float(host[5]), bsz)
    iter_stats[f'{prefix}stdp'] = (float(host[6]), bsz)
    iter_stats[f'{prefix}stdwq'] = (float(host[7]), bsz)

    loss = stats[0, 0]   # device scalar (analogous to returning a torch tensor)
    return loss, iter_stats


# ---------------------------------------------------------------------------
if __name__ == "__main__":
    B, S, D, K, VOCAB = 4, 8, 128, 256, 64   # projection_size=D, queue_size=K

    key = jax.random.PRNGKey(0)
    k_emb, k_w, k_b, k_queue, k_tok = jax.random.split(key, 5)

    emb_table = 0.02 * jax.random.normal(k_emb, (VOCAB, D), dtype=jnp.float32)
    W = jax.random.normal(k_w, (D, D), dtype=jnp.float32) / jnp.sqrt(D)
    b = 0.01 * jax.random.normal(k_b, (1, D), dtype=jnp.float32)

    # p_queue ~ randn(projection_size, queue_size), L2-normalized along dim=0.
    # (For production-size queues store this in bfloat16: the kernel casts the
    #  LHS and accumulates in f32 via preferred_element_type.)
    p_queue = jax.random.normal(k_queue, (D, K), dtype=jnp.float32)
    p_queue = p_queue / jnp.linalg.norm(p_queue, axis=0, keepdims=True)

    params = {
        'emb': emb_table,
        'Wq': W, 'bq': b,
        'Wk': W, 'bk': b,     # encoder_k is a deepcopy of encoder_q at init
        'p_queue': p_queue,
    }

    tk1, tk2, tk3, tk4 = jax.random.split(k_tok, 4)
    q_tokens = jax.random.randint(tk1, (B, S), 0, VOCAB)
    p_tokens = jax.random.randint(tk2, (B, S), 0, VOCAB)
    wp_tokens = jax.random.randint(tk3, (B, S), 0, VOCAB)
    k_tokens = jax.random.randint(tk4, (B, S), 0, VOCAB)  # unused by forward

    ones_mask = jnp.ones((B, S), dtype=jnp.float32)
    q_mask = ones_mask.at[:, -2:].set(0.0)   # some padding in queries
    p_mask = ones_mask
    wp_mask = ones_mask
    k_mask = ones_mask

    loss, stats = time_moco_q1_forward(
        params, q_tokens, q_mask, k_tokens, k_mask,
        stats_prefix='', iter_stats={},
        wp_tokens=wp_tokens, wp_mask=wp_mask,
        p_tokens=p_tokens, p_mask=p_mask,
    )
    jax.block_until_ready(loss)
    print("KERNEL_OK")
</pallas_src>

<mosaic_0001>
module attributes {stable_mosaic.version = 11 : i64} {
  func.func @_fused_kernel(%arg0: i32, %arg1: memref<96x1xi32, #tpu.memory_space<vmem>>, %arg2: memref<1x96xf32, #tpu.memory_space<vmem>>, %arg3: memref<64x128xf32, #tpu.memory_space<vmem>>, %arg4: memref<128x128xf32, #tpu.memory_space<vmem>>, %arg5: memref<1x128xf32, #tpu.memory_space<vmem>>, %arg6: memref<128x128xf32, #tpu.memory_space<vmem>>, %arg7: memref<1x128xf32, #tpu.memory_space<vmem>>, %arg8: memref<128x128xf32, #tpu.memory_space<vmem>>, %arg9: memref<1x128xf32, #tpu.memory_space<vmem>>, %arg10: memref<16x128xf32, #tpu.memory_space<vmem>>, %arg11: memref<4x128xf32, #tpu.memory_space<vmem>>, %arg12: memref<4x1xf32, #tpu.memory_space<vmem>>, %arg13: memref<4x1xf32, #tpu.memory_space<vmem>>, %arg14: memref<4x1xf32, #tpu.memory_space<vmem>>, %arg15: memref<4x1xf32, #tpu.memory_space<vmem>>, %arg16: memref<4x1xf32, #tpu.memory_space<vmem>>, %arg17: memref<4x1xf32, #tpu.memory_space<vmem>>, %arg18: memref<4x1xf32, #tpu.memory_space<vmem>>, %arg19: memref<4x1xf32, #tpu.memory_space<vmem>>) attributes {dimension_semantics = [#tpu.dimension_semantics<arbitrary>], iteration_bounds = array<i64: 2>, scalar_prefetch = 0 : i64, scratch_operands = 10 : i64, tpu.core_type = #tpu.core_type<tc>, window_params = [{pipeline_mode = #tpu.pipeline_mode<synchronous>, transform_indices = @transform_0, window_bounds = array<i64: 96, 1>}, {pipeline_mode = #tpu.pipeline_mode<synchronous>, transform_indices = @transform_1, window_bounds = array<i64: 1, 96>}, {pipeline_mode = #tpu.pipeline_mode<synchronous>, transform_indices = @transform_2, window_bounds = array<i64: 64, 128>}, {pipeline_mode = #tpu.pipeline_mode<synchronous>, transform_indices = @transform_3, window_bounds = array<i64: 128, 128>}, {pipeline_mode = #tpu.pipeline_mode<synchronous>, transform_indices = @transform_4, window_bounds = array<i64: 1, 128>}, {pipeline_mode = #tpu.pipeline_mode<synchronous>, transform_indices = @transform_5, window_bounds = array<i64: 128, 128>}, {pipeline_mode = #tpu.pipeline_mode<synchronous>, transform_indices = @transform_6, window_bounds = array<i64: 1, 128>}, {transform_indices = @transform_7, window_bounds = array<i64: 128, 128>}, {pipeline_mode = #tpu.pipeline_mode<synchronous>, transform_indices = @transform_8, window_bounds = array<i64: 1, 128>}]} {
    %c0_i32 = arith.constant 0 : i32
    %0 = arith.cmpi eq, %arg0, %c0_i32 : i32
    %1 = arith.extui %0 : i1 to i32
    %c0_i32_0 = arith.constant 0 : i32
    %2 = arith.cmpi ne, %1, %c0_i32_0 : i32
    scf.if %2 {
      %c0_52 = arith.constant 0 : index
      %c0_53 = arith.constant 0 : index
      %73 = vector.load %arg1[%c0_52, %c0_53] : memref<96x1xi32, #tpu.memory_space<vmem>>, vector<96x1xi32>
      %74 = tpu.iota {dimensions = array<i32: 1>} : vector<96x64xi32>
      %75 = vector.broadcast %73 : vector<96x1xi32> to vector<96x64xi32>
      %76 = arith.cmpi eq, %74, %75 : vector<96x64xi32>
      %77 = arith.extui %76 : vector<96x64xi1> to vector<96x64xi32>
      %78 = arith.sitofp %77 : vector<96x64xi32> to vector<96x64xf32>
      %c0_54 = arith.constant 0 : index
      %c0_55 = arith.constant 0 : index
      %79 = vector.load %arg3[%c0_54, %c0_55] : memref<64x128xf32, #tpu.memory_space<vmem>>, vector<64x128xf32>
      %cst_56 = arith.constant dense<0.000000e+00> : vector<96x128xf32>
      %80 = tpu.matmul %78, %79, %cst_56 {dimension_numbers = #tpu.dot_dimension_numbers<[1], [0], [0], [1], [0, 0, 1, 1], [], []>} : vector<96x64xf32>, vector<64x128xf32>, vector<96x128xf32> -> vector<96x128xf32>
      %81 = tpu.iota {dimensions = array<i32: 0>} : vector<12x96xi32>
      %82 = tpu.iota {dimensions = array<i32: 1>} : vector<12x96xi32>
      %c8_i32 = arith.constant 8 : i32
      %83 = vector.broadcast %c8_i32 : i32 to vector<12x96xi32>
      %84 = arith.muli %81, %83 : vector<12x96xi32>
      %85 = arith.cmpi sge, %82, %84 : vector<12x96xi32>
      %c8_i32_57 = arith.constant 8 : i32
      %86 = vector.broadcast %c8_i32_57 : i32 to vector<12x96xi32>
      %87 = arith.muli %81, %86 : vector<12x96xi32>
      %c8_i32_58 = arith.constant 8 : i32
      %88 = vector.broadcast %c8_i32_58 : i32 to vector<12x96xi32>
      %89 = arith.addi %87, %88 : vector<12x96xi32>
      %90 = arith.cmpi slt, %82, %89 : vector<12x96xi32>
      %91 = arith.andi %85, %90 : vector<12x96xi1>
      %92 = arith.extui %91 : vector<12x96xi1> to vector<12x96xi32>
      %93 = arith.sitofp %92 : vector<12x96xi32> to vector<12x96xf32>
      %c0_59 = arith.constant 0 : index
      %c0_60 = arith.constant 0 : index
      %94 = vector.load %arg2[%c0_59, %c0_60] : memref<1x96xf32, #tpu.memory_space<vmem>>, vector<1x96xf32>
      %95 = vector.broadcast %94 : vector<1x96xf32> to vector<12x96xf32>
      %96 = arith.mulf %93, %95 : vector<12x96xf32>
      %cst_61 = arith.constant dense<0.000000e+00> : vector<12x128xf32>
      %97 = tpu.matmul %96, %80, %cst_61 {dimension_numbers = #tpu.dot_dimension_numbers<[1], [0], [0], [1], [0, 0, 1, 1], [], []>} : vector<12x96xf32>, vector<96x128xf32>, vector<12x128xf32> -> vector<12x128xf32>
      %98 = vector.extract_strided_slice %97 {offsets = [0, 0], sizes = [8, 128], strides = [1, 1]} : vector<12x128xf32> to vector<8x128xf32>
      %c0_62 = arith.constant 0 : index
      %c0_63 = arith.constant 0 : index
      %99 = vector.load %arg4[%c0_62, %c0_63] : memref<128x128xf32, #tpu.memory_space<vmem>>, vector<128x128xf32>
      %cst_64 = arith.constant dense<0.000000e+00> : vector<8x128xf32>
      %100 = tpu.matmul %98, %99, %cst_64 {dimension_numbers = #tpu.dot_dimension_numbers<[1], [0], [0], [1], [0, 0, 1, 1], [], []>} : vector<8x128xf32>, vector<128x128xf32>, vector<8x128xf32> -> vector<8x128xf32>
      %c0_65 = arith.constant 0 : index
      %c0_66 = arith.constant 0 : index
      %101 = vector.load %arg5[%c0_65, %c0_66] : memref<1x128xf32, #tpu.memory_space<vmem>>, vector<1x128xf32>
      %102 = vector.broadcast %101 : vector<1x128xf32> to vector<8x128xf32>
      %103 = arith.addf %100, %102 : vector<8x128xf32>
      %104 = vector.extract_strided_slice %97 {offsets = [8, 0], sizes = [4, 128], strides = [1, 1]} : vector<12x128xf32> to vector<4x128xf32>
      %c0_67 = arith.constant 0 : index
      %c0_68 = arith.constant 0 : index
      %105 = vector.load %arg6[%c0_67, %c0_68] : memref<128x128xf32, #tpu.memory_space<vmem>>, vector<128x128xf32>
      %cst_69 = arith.constant dense<0.000000e+00> : vector<4x128xf32>
      %106 = tpu.matmul %104, %105, %cst_69 {dimension_numbers = #tpu.dot_dimension_numbers<[1], [0], [0], [1], [0, 0, 1, 1], [], []>} : vector<4x128xf32>, vector<128x128xf32>, vector<4x128xf32> -> vector<4x128xf32>
      %c0_70 = arith.constant 0 : index
      %c0_71 = arith.constant 0 : index
      %107 = vector.load %arg7[%c0_70, %c0_71] : memref<1x128xf32, #tpu.memory_space<vmem>>, vector<1x128xf32>
      %108 = vector.broadcast %107 : vector<1x128xf32> to vector<4x128xf32>
      %109 = arith.addf %106, %108 : vector<4x128xf32>
      %110 = vector.extract_strided_slice %103 {offsets = [0, 0], sizes = [4, 128], strides = [1, 1]} : vector<8x128xf32> to vector<4x128xf32>
      %111 = vector.extract_strided_slice %103 {offsets = [4, 0], sizes = [4, 128], strides = [1, 1]} : vector<8x128xf32> to vector<4x128xf32>
      %112 = arith.mulf %110, %110 : vector<4x128xf32>
      %cst_72 = arith.constant dense<0.000000e+00> : vector<4xf32>
      %113 = vector.multi_reduction <add>, %112, %cst_72 [1] : vector<4x128xf32> to vector<4xf32>
      %114 = vector.shape_cast %113 : vector<4xf32> to vector<4x1xf32>
      %cst_73 = arith.constant 1.000000e-24 : f32
      %115 = vector.broadcast %cst_73 : f32 to vector<4x1xf32>
      %116 = arith.maximumf %114, %115 : vector<4x1xf32>
      %117 = math.rsqrt %116 : vector<4x1xf32>
      %118 = vector.broadcast %117 : vector<4x1xf32> to vector<4x128xf32>
      %119 = arith.mulf %110, %118 : vector<4x128xf32>
      %120 = arith.mulf %111, %111 : vector<4x128xf32>
      %cst_74 = arith.constant dense<0.000000e+00> : vector<4xf32>
      %121 = vector.multi_reduction <add>, %120, %cst_74 [1] : vector<4x128xf32> to vector<4xf32>
      %122 = vector.shape_cast %121 : vector<4xf32> to vector<4x1xf32>
      %cst_75 = arith.constant 1.000000e-24 : f32
      %123 = vector.broadcast %cst_75 : f32 to vector<4x1xf32>
      %124 = arith.maximumf %122, %123 : vector<4x1xf32>
      %125 = math.rsqrt %124 : vector<4x1xf32>
      %126 = vector.broadcast %125 : vector<4x1xf32> to vector<4x128xf32>
      %127 = arith.mulf %111, %126 : vector<4x128xf32>
      %128 = arith.mulf %109, %109 : vector<4x128xf32>
      %cst_76 = arith.constant dense<0.000000e+00> : vector<4xf32>
      %129 = vector.multi_reduction <add>, %128, %cst_76 [1] : vector<4x128xf32> to vector<4xf32>
      %130 = vector.shape_cast %129 : vector<4xf32> to vector<4x1xf32>
      %cst_77 = arith.constant 1.000000e-24 : f32
      %131 = vector.broadcast %cst_77 : f32 to vector<4x1xf32>
      %132 = arith.maximumf %130, %131 : vector<4x1xf32>
      %133 = math.rsqrt %132 : vector<4x1xf32>
      %134 = vector.broadcast %133 : vector<4x1xf32> to vector<4x128xf32>
      %135 = arith.mulf %109, %134 : vector<4x128xf32>
      %c0_78 = arith.constant 0 : index
      %c0_79 = arith.constant 0 : index
      %136 = vector.load %arg10[%c0_78, %c0_79] : memref<16x128xf32, #tpu.memory_space<vmem>>, vector<4x128xf32>
      tpu.vector_store %arg10[%c0_78, %c0_79], %119 {strides = array<i32>} : memref<16x128xf32, #tpu.memory_space<vmem>>, vector<4x128xf32>,
      %c4 = arith.constant 4 : index
      %c0_80 = arith.constant 0 : index
      %137 = vector.load %arg10[%c4, %c0_80] : memref<16x128xf32, #tpu.memory_space<vmem>>, vector<4x128xf32>
      tpu.vector_store %arg10[%c4, %c0_80], %127 {strides = array<i32>} : memref<16x128xf32, #tpu.memory_space<vmem>>, vector<4x128xf32>,
      %cst_81 = arith.constant 8.000000e-01 : f32
      %138 = vector.broadcast %cst_81 : f32 to vector<4x128xf32>
      %139 = arith.mulf %138, %119 : vector<4x128xf32>
      %cst_82 = arith.constant 2.000000e-01 : f32
      %140 = vector.broadcast %cst_82 : f32 to vector<4x128xf32>
      %141 = arith.mulf %140, %127 : vector<4x128xf32>
      %142 = arith.addf %139, %141 : vector<4x128xf32>
      %c8 = arith.constant 8 : index
      %c0_83 = arith.constant 0 : index
      %143 = vector.load %arg10[%c8, %c0_83] : memref<16x128xf32, #tpu.memory_space<vmem>>, vector<4x128xf32>
      tpu.vector_store %arg10[%c8, %c0_83], %142 {strides = array<i32>} : memref<16x128xf32, #tpu.memory_space<vmem>>, vector<4x128xf32>,
      %144 = arith.subf %127, %119 : vector<4x128xf32>
      %c12 = arith.constant 12 : index
      %c0_84 = arith.constant 0 : index
      %145 = vector.load %arg10[%c12, %c0_84] : memref<16x128xf32, #tpu.memory_space<vmem>>, vector<4x128xf32>
      tpu.vector_store %arg10[%c12, %c0_84], %144 {strides = array<i32>} : memref<16x128xf32, #tpu.memory_space<vmem>>, vector<4x128xf32>,
      %c0_85 = arith.constant 0 : index
      %c0_86 = arith.constant 0 : index
      %146 = vector.load %arg11[%c0_85, %c0_86] : memref<4x128xf32, #tpu.memory_space<vmem>>, vector<4x128xf32>
      tpu.vector_store %arg11[%c0_85, %c0_86], %135 {strides = array<i32>} : memref<4x128xf32, #tpu.memory_space<vmem>>, vector<4x128xf32>,
      %cst_87 = arith.constant 0xFF800000 : f32
      %147 = vector.broadcast %cst_87 : f32 to vector<4x1xf32>
      %cst_88 = arith.constant 0.000000e+00 : f32
      %148 = vector.broadcast %cst_88 : f32 to vector<4x1xf32>
      %c0_89 = arith.constant 0 : index
      %c0_90 = arith.constant 0 : index
      %149 = vector.load %arg12[%c0_89, %c0_90] : memref<4x1xf32, #tpu.memory_space<vmem>>, vector<4x1xf32>
      tpu.vector_store %arg12[%c0_89, %c0_90], %147 {strides = array<i32>} : memref<4x1xf32, #tpu.memory_space<vmem>>, vector<4x1xf32>,
      %c0_91 = arith.constant 0 : index
      %c0_92 = arith.constant 0 : index
      %150 = vector.load %arg15[%c0_91, %c0_92] : memref<4x1xf32, #tpu.memory_space<vmem>>, vector<4x1xf32>
      tpu.vector_store %arg15[%c0_91, %c0_92], %147 {strides = array<i32>} : memref<4x1xf32, #tpu.memory_space<vmem>>, vector<4x1xf32>,
      %c0_93 = arith.constant 0 : index
      %c0_94 = arith.constant 0 : index
      %151 = vector.load %arg18[%c0_93, %c0_94] : memref<4x1xf32, #tpu.memory_space<vmem>>, vector<4x1xf32>
      tpu.vector_store %arg18[%c0_93, %c0_94], %147 {strides = array<i32>} : memref<4x1xf32, #tpu.memory_space<vmem>>, vector<4x1xf32>,
      %c0_95 = arith.constant 0 : index
      %c0_96 = arith.constant 0 : index
      %152 = vector.load %arg13[%c0_95, %c0_96] : memref<4x1xf32, #tpu.memory_space<vmem>>, vector<4x1xf32>
      tpu.vector_store %arg13[%c0_95, %c0_96], %148 {strides = array<i32>} : memref<4x1xf32, #tpu.memory_space<vmem>>, vector<4x1xf32>,
      %c0_97 = arith.constant 0 : index
      %c0_98 = arith.constant 0 : index
      %153 = vector.load %arg16[%c0_97, %c0_98] : memref<4x1xf32, #tpu.memory_space<vmem>>, vector<4x1xf32>
      tpu.vector_store %arg16[%c0_97, %c0_98], %148 {strides = array<i32>} : memref<4x1xf32, #tpu.memory_space<vmem>>, vector<4x1xf32>,
      %c0_99 = arith.constant 0 : index
      %c0_100 = arith.constant 0 : index
      %154 = vector.load %arg14[%c0_99, %c0_100] : memref<4x1xf32, #tpu.memory_space<vmem>>, vector<4x1xf32>
      tpu.vector_store %arg14[%c0_99, %c0_100], %148 {strides = array<i32>} : memref<4x1xf32, #tpu.memory_space<vmem>>, vector<4x1xf32>,
      %c0_101 = arith.constant 0 : index
      %c0_102 = arith.constant 0 : index
      %155 = vector.load %arg17[%c0_101, %c0_102] : memref<4x1xf32, #tpu.memory_space<vmem>>, vector<4x1xf32>
      tpu.vector_store %arg17[%c0_101, %c0_102], %148 {strides = array<i32>} : memref<4x1xf32, #tpu.memory_space<vmem>>, vector<4x1xf32>,
      %c0_103 = arith.constant 0 : index
      %c0_104 = arith.constant 0 : index
      %156 = vector.load %arg19[%c0_103, %c0_104] : memref<4x1xf32, #tpu.memory_space<vmem>>, vector<4x1xf32>
      tpu.vector_store %arg19[%c0_103, %c0_104], %148 {strides = array<i32>} : memref<4x1xf32, #tpu.memory_space<vmem>>, vector<4x1xf32>,
    } else {
    }
    %c0 = arith.constant 0 : index
    %c0_1 = arith.constant 0 : index
    %3 = vector.load %arg8[%c0, %c0_1] : memref<128x128xf32, #tpu.memory_space<vmem>>, vector<128x128xf32>
    %c0_2 = arith.constant 0 : index
    %c0_3 = arith.constant 0 : index
    %4 = vector.load %arg10[%c0_2, %c0_3] : memref<16x128xf32, #tpu.memory_space<vmem>>, vector<16x128xf32>
    %cst = arith.constant dense<0.000000e+00> : vector<16x128xf32>
    %5 = tpu.matmul %4, %3, %cst {dimension_numbers = #tpu.dot_dimension_numbers<[1], [0], [0], [1], [0, 0, 1, 1], [], []>} : vector<16x128xf32>, vector<128x128xf32>, vector<16x128xf32> -> vector<16x128xf32>
    %cst_4 = arith.constant 2.000000e+01 : f32
    %6 = vector.broadcast %cst_4 : f32 to vector<16x128xf32>
    %7 = arith.mulf %5, %6 : vector<16x128xf32>
    %8 = vector.extract_strided_slice %7 {offsets = [0, 0], sizes = [4, 128], strides = [1, 1]} : vector<16x128xf32> to vector<4x128xf32>
    %9 = vector.extract_strided_slice %7 {offsets = [4, 0], sizes = [4, 128], strides = [1, 1]} : vector<16x128xf32> to vector<4x128xf32>
    %10 = vector.extract_strided_slice %7 {offsets = [8, 0], sizes = [4, 128], strides = [1, 1]} : vector<16x128xf32> to vector<4x128xf32>
    %11 = vector.extract_strided_slice %7 {offsets = [12, 0], sizes = [4, 128], strides = [1, 1]} : vector<16x128xf32> to vector<4x128xf32>
    %cst_5 = arith.constant dense<0xFF800000> : vector<4xf32>
    %12 = vector.multi_reduction <maximumf>, %8, %cst_5 [1] : vector<4x128xf32> to vector<4xf32>
    %13 = vector.shape_cast %12 : vector<4xf32> to vector<4x1xf32>
    %c0_6 = arith.constant 0 : index
    %c0_7 = arith.constant 0 : index
    %14 = vector.load %arg12[%c0_6, %c0_7] : memref<4x1xf32, #tpu.memory_space<vmem>>, vector<4x1xf32>
    %15 = arith.maximumf %14, %13 : vector<4x1xf32>
    %c0_8 = arith.constant 0 : index
    %c0_9 = arith.constant 0 : index
    %16 = vector.load %arg13[%c0_8, %c0_9] : memref<4x1xf32, #tpu.memory_space<vmem>>, vector<4x1xf32>
    %c0_10 = arith.constant 0 : index
    %c0_11 = arith.constant 0 : index
    %17 = vector.load %arg12[%c0_10, %c0_11] : memref<4x1xf32, #tpu.memory_space<vmem>>, vector<4x1xf32>
    %18 = arith.subf %17, %15 : vector<4x1xf32>
    %19 = math.exp %18 : vector<4x1xf32>
    %20 = arith.mulf %16, %19 : vector<4x1xf32>
    %21 = vector.broadcast %15 : vector<4x1xf32> to vector<4x128xf32>
    %22 = arith.subf %8, %21 : vector<4x128xf32>
    %23 = math.exp %22 : vector<4x128xf32>
    %cst_12 = arith.constant dense<0.000000e+00> : vector<4xf32>
    %24 = vector.multi_reduction <add>, %23, %cst_12 [1] : vector<4x128xf32> to vector<4xf32>
    %25 = vector.shape_cast %24 : vector<4xf32> to vector<4x1xf32>
    %26 = arith.addf %20, %25 : vector<4x1xf32>
    %c0_13 = arith.constant 0 : index
    %c0_14 = arith.constant 0 : index
    %27 = vector.load %arg13[%c0_13, %c0_14] : memref<4x1xf32, #tpu.memory_space<vmem>>, vector<4x1xf32>
    tpu.vector_store %arg13[%c0_13, %c0_14], %26 {strides = array<i32>} : memref<4x1xf32, #tpu.memory_space<vmem>>, vector<4x1xf32>,
    %c0_15 = arith.constant 0 : index
    %c0_16 = arith.constant 0 : index
    %28 = vector.load %arg12[%c0_15, %c0_16] : memref<4x1xf32, #tpu.memory_space<vmem>>, vector<4x1xf32>
    tpu.vector_store %arg12[%c0_15, %c0_16], %15 {strides = array<i32>} : memref<4x1xf32, #tpu.memory_space<vmem>>, vector<4x1xf32>,
    %c0_17 = arith.constant 0 : index
    %c0_18 = arith.constant 0 : index
    %29 = vector.load %arg14[%c0_17, %c0_18] : memref<4x1xf32, #tpu.memory_space<vmem>>, vector<4x1xf32>
    %cst_19 = arith.constant dense<0.000000e+00> : vector<4xf32>
    %30 = vector.multi_reduction <add>, %8, %cst_19 [1] : vector<4x128xf32> to vector<4xf32>
    %31 = vector.shape_cast %30 : vector<4xf32> to vector<4x1xf32>
    %32 = arith.addf %29, %31 : vector<4x1xf32>
    %c0_20 = arith.constant 0 : index
    %c0_21 = arith.constant 0 : index
    %33 = vector.load %arg14[%c0_20, %c0_21] : memref<4x1xf32, #tpu.memory_space<vmem>>, vector<4x1xf32>
    tpu.vector_store %arg14[%c0_20, %c0_21], %32 {strides = array<i32>} : memref<4x1xf32, #tpu.memory_space<vmem>>, vector<4x1xf32>,
    %cst_22 = arith.constant dense<0xFF800000> : vector<4xf32>
    %34 = vector.multi_reduction <maximumf>, %9, %cst_22 [1] : vector<4x128xf32> to vector<4xf32>
    %35 = vector.shape_cast %34 : vector<4xf32> to vector<4x1xf32>
    %c0_23 = arith.constant 0 : index
    %c0_24 = arith.constant 0 : index
    %36 = vector.load %arg15[%c0_23, %c0_24] : memref<4x1xf32, #tpu.memory_space<vmem>>, vector<4x1xf32>
    %37 = arith.maximumf %36, %35 : vector<4x1xf32>
    %c0_25 = arith.constant 0 : index
    %c0_26 = arith.constant 0 : index
    %38 = vector.load %arg16[%c0_25, %c0_26] : memref<4x1xf32, #tpu.memory_space<vmem>>, vector<4x1xf32>
    %c0_27 = arith.constant 0 : index
    %c0_28 = arith.constant 0 : index
    %39 = vector.load %arg15[%c0_27, %c0_28] : memref<4x1xf32, #tpu.memory_space<vmem>>, vector<4x1xf32>
    %40 = arith.subf %39, %37 : vector<4x1xf32>
    %41 = math.exp %40 : vector<4x1xf32>
    %42 = arith.mulf %38, %41 : vector<4x1xf32>
    %43 = vector.broadcast %37 : vector<4x1xf32> to vector<4x128xf32>
    %44 = arith.subf %9, %43 : vector<4x128xf32>
    %45 = math.exp %44 : vector<4x128xf32>
    %cst_29 = arith.constant dense<0.000000e+00> : vector<4xf32>
    %46 = vector.multi_reduction <add>, %45, %cst_29 [1] : vector<4x128xf32> to vector<4xf32>
    %47 = vector.shape_cast %46 : vector<4xf32> to vector<4x1xf32>
    %48 = arith.addf %42, %47 : vector<4x1xf32>
    %c0_30 = arith.constant 0 : index
    %c0_31 = arith.constant 0 : index
    %49 = vector.load %arg16[%c0_30, %c0_31] : memref<4x1xf32, #tpu.memory_space<vmem>>, vector<4x1xf32>
    tpu.vector_store %arg16[%c0_30, %c0_31], %48 {strides = array<i32>} : memref<4x1xf32, #tpu.memory_space<vmem>>, vector<4x1xf32>,
    %c0_32 = arith.constant 0 : index
    %c0_33 = arith.constant 0 : index
    %50 = vector.load %arg15[%c0_32, %c0_33] : memref<4x1xf32, #tpu.memory_space<vmem>>, vector<4x1xf32>
    tpu.vector_store %arg15[%c0_32, %c0_33], %37 {strides = array<i32>} : memref<4x1xf32, #tpu.memory_space<vmem>>, vector<4x1xf32>,
    %c0_34 = arith.constant 0 : index
    %c0_35 = arith.constant 0 : index
    %51 = vector.load %arg17[%c0_34, %c0_35] : memref<4x1xf32, #tpu.memory_space<vmem>>, vector<4x1xf32>
    %cst_36 = arith.constant dense<0.000000e+00> : vector<4xf32>
    %52 = vector.multi_reduction <add>, %9, %cst_36 [1] : vector<4x128xf32> to vector<4xf32>
    %53 = vector.shape_cast %52 : vector<4xf32> to vector<4x1xf32>
    %54 = arith.addf %51, %53 : vector<4x1xf32>
    %c0_37 = arith.constant 0 : index
    %c0_38 = arith.constant 0 : index
    %55 = vector.load %arg17[%c0_37, %c0_38] : memref<4x1xf32, #tpu.memory_space<vmem>>, vector<4x1xf32>
    tpu.vector_store %arg17[%c0_37, %c0_38], %54 {strides = array<i32>} : memref<4x1xf32, #tpu.memory_space<vmem>>, vector<4x1xf32>,
    %c0_39 = arith.constant 0 : index
    %c0_40 = arith.constant 0 : index
    %56 = vector.load %arg18[%c0_39, %c0_40] : memref<4x1xf32, #tpu.memory_space<vmem>>, vector<4x1xf32>
    %cst_41 = arith.constant dense<0xFF800000> : vector<4xf32>
    %57 = vector.multi_reduction <maximumf>, %10, %cst_41 [1] : vector<4x128xf32> to vector<4xf32>
    %58 = vector.shape_cast %57 : vector<4xf32> to vector<4x1xf32>
    %59 = arith.maximumf %56, %58 : vector<4x1xf32>
    %c0_42 = arith.constant 0 : index
    %c0_43 = arith.constant 0 : index
    %60 = vector.load %arg18[%c0_42, %c0_43] : memref<4x1xf32, #tpu.memory_space<vmem>>, vector<4x1xf32>
    tpu.vector_store %arg18[%c0_42, %c0_43], %59 {strides = array<i32>} : memref<4x1xf32, #tpu.memory_space<vmem>>, vector<4x1xf32>,
    %c0_44 = arith.constant 0 : index
    %c0_45 = arith.constant 0 : index
    %61 = vector.load %arg19[%c0_44, %c0_45] : memref<4x1xf32, #tpu.memory_space<vmem>>, vector<4x1xf32>
    %cst_46 = arith.constant 2.000000e+00 : f32
    %62 = vector.broadcast %cst_46 : f32 to vector<4x128xf32>
    %63 = arith.addf %11, %62 : vector<4x128xf32>
    %cst_47 = arith.constant 0.000000e+00 : f32
    %64 = vector.broadcast %cst_47 : f32 to vector<4x128xf32>
    %65 = arith.maximumf %64, %63 : vector<4x128xf32>
    %cst_48 = arith.constant dense<0.000000e+00> : vector<4xf32>
    %66 = vector.multi_reduction <add>, %65, %cst_48 [1] : vector<4x128xf32> to vector<4xf32>
    %67 = vector.shape_cast %66 : vector<4xf32> to vector<4x1xf32>
    %68 = arith.addf %61, %67 : vector<4x1xf32>
    %c0_49 = arith.constant 0 : index
    %c0_50 = arith.constant 0 : index
    %69 = vector.load %arg19[%c0_49, %c0_50] : memref<4x1xf32, #tpu.memory_space<vmem>>, vector<4x1xf32>
    tpu.vector_store %arg19[%c0_49, %c0_50], %68 {strides = array<i32>} : memref<4x1xf32, #tpu.memory_space<vmem>>, vector<4x1xf32>,
    %c1_i32 = arith.constant 1 : i32
    %70 = arith.cmpi eq, %arg0, %c1_i32 : i32
    %71 = arith.extui %70 : i1 to i32
    %c0_i32_51 = arith.constant 0 : i32
    %72 = arith.cmpi ne, %71, %c0_i32_51 : i32
    scf.if %72 {
      %c0_52 = arith.constant 0 : index
      %c0_53 = arith.constant 0 : index
      %73 = vector.load %arg10[%c0_52, %c0_53] : memref<16x128xf32, #tpu.memory_space<vmem>>, vector<4x128xf32>
      %c4 = arith.constant 4 : index
      %c0_54 = arith.constant 0 : index
      %74 = vector.load %arg10[%c4, %c0_54] : memref<16x128xf32, #tpu.memory_space<vmem>>, vector<4x128xf32>
      %c0_55 = arith.constant 0 : index
      %c0_56 = arith.constant 0 : index
      %75 = vector.load %arg11[%c0_55, %c0_56] : memref<4x128xf32, #tpu.memory_space<vmem>>, vector<4x128xf32>
      %76 = arith.mulf %73, %75 : vector<4x128xf32>
      %cst_57 = arith.constant dense<0.000000e+00> : vector<4xf32>
      %77 = vector.multi_reduction <add>, %76, %cst_57 [1] : vector<4x128xf32> to vector<4xf32>
      %78 = vector.shape_cast %77 : vector<4xf32> to vector<4x1xf32>
      %cst_58 = arith.constant 2.000000e+01 : f32
      %79 = vector.broadcast %cst_58 : f32 to vector<4x1xf32>
      %80 = arith.mulf %78, %79 : vector<4x1xf32>
      %81 = arith.mulf %74, %75 : vector<4x128xf32>
      %cst_59 = arith.constant dense<0.000000e+00> : vector<4xf32>
      %82 = vector.multi_reduction <add>, %81, %cst_59 [1] : vector<4x128xf32> to vector<4xf32>
      %83 = vector.shape_cast %82 : vector<4xf32> to vector<4x1xf32>
      %cst_60 = arith.constant 2.000000e+01 : f32
      %84 = vector.broadcast %cst_60 : f32 to vector<4x1xf32>
      %85 = arith.mulf %83, %84 : vector<4x1xf32>
      %c0_61 = arith.constant 0 : index
      %c0_62 = arith.constant 0 : index
      %86 = vector.load %arg12[%c0_61, %c0_62] : memref<4x1xf32, #tpu.memory_space<vmem>>, vector<4x1xf32>
      %c0_63 = arith.constant 0 : index
      %c0_64 = arith.constant 0 : index
      %87 = vector.load %arg13[%c0_63, %c0_64] : memref<4x1xf32, #tpu.memory_space<vmem>>, vector<4x1xf32>
      %c0_65 = arith.constant 0 : index
      %c0_66 = arith.constant 0 : index
      %88 = vector.load %arg14[%c0_65, %c0_66] : memref<4x1xf32, #tpu.memory_space<vmem>>, vector<4x1xf32>
      %89 = arith.maximumf %80, %86 : vector<4x1xf32>
      %90 = arith.subf %80, %89 : vector<4x1xf32>
      %91 = math.exp %90 : vector<4x1xf32>
      %92 = arith.subf %86, %89 : vector<4x1xf32>
      %93 = math.exp %92 : vector<4x1xf32>
      %94 = arith.mulf %87, %93 : vector<4x1xf32>
      %95 = arith.addf %91, %94 : vector<4x1xf32>
      %96 = math.log %95 : vector<4x1xf32>
      %97 = arith.addf %89, %96 : vector<4x1xf32>
      %98 = arith.subf %80, %97 : vector<4x1xf32>
      %cst_67 = arith.constant 2.560000e+02 : f32
      %99 = vector.broadcast %cst_67 : f32 to vector<4x1xf32>
      %100 = arith.mulf %99, %97 : vector<4x1xf32>
      %101 = arith.subf %88, %100 : vector<4x1xf32>
      %102 = arith.addf %98, %101 : vector<4x1xf32>
      %cst_68 = arith.constant 0.000000e+00 : f32
      %103 = vector.broadcast %cst_68 : f32 to vector<4x1xf32>
      %104 = arith.subf %103, %98 : vector<4x1xf32>
      %cst_69 = arith.constant 0.899999976 : f32
      %105 = vector.broadcast %cst_69 : f32 to vector<4x1xf32>
      %106 = arith.mulf %105, %104 : vector<4x1xf32>
      %cst_70 = arith.constant 0.000000e+00 : f32
      %107 = vector.broadcast %cst_70 : f32 to vector<4x1xf32>
      %108 = arith.subf %107, %102 : vector<4x1xf32>
      %cst_71 = arith.constant 2.570000e+02 : f32
      %109 = vector.broadcast %cst_71 : f32 to vector<4x1xf32>
      %110 = arith.divf %108, %109 : vector<4x1xf32>
      %cst_72 = arith.constant 1.000000e-01 : f32
      %111 = vector.broadcast %cst_72 : f32 to vector<4x1xf32>
      %112 = arith.mulf %111, %110 : vector<4x1xf32>
      %113 = arith.addf %106, %112 : vector<4x1xf32>
      %114 = arith.cmpf oge, %80, %86 : vector<4x1xf32>
      %115 = arith.extui %114 : vector<4x1xi1> to vector<4x1xi32>
      %116 = arith.sitofp %115 : vector<4x1xi32> to vector<4x1xf32>
      %117 = vector.shape_cast %113 : vector<4x1xf32> to vector<1x4x1xf32>
      %cst_73 = arith.constant dense<0.000000e+00> : vector<1xf32>
      %118 = vector.multi_reduction <add>, %117, %cst_73 [1, 2] : vector<1x4x1xf32> to vector<1xf32>
      %119 = vector.shape_cast %118 : vector<1xf32> to vector<1x1x1xf32>
      %120 = vector.extract %119[0, 0, 0] : f32 from vector<1x1x1xf32>
      %cst_74 = arith.constant 4.000000e+00 : f32
      %121 = arith.divf %120, %cst_74 : f32
      %c0_75 = arith.constant 0 : index
      %c0_76 = arith.constant 0 : index
      %122 = vector.load %arg15[%c0_75, %c0_76] : memref<4x1xf32, #tpu.memory_space<vmem>>, vector<4x1xf32>
      %c0_77 = arith.constant 0 : index
      %c0_78 = arith.constant 0 : index
      %123 = vector.load %arg16[%c0_77, %c0_78] : memref<4x1xf32, #tpu.memory_space<vmem>>, vector<4x1xf32>
      %c0_79 = arith.constant 0 : index
      %c0_80 = arith.constant 0 : index
      %124 = vector.load %arg17[%c0_79, %c0_80] : memref<4x1xf32, #tpu.memory_space<vmem>>, vector<4x1xf32>
      %125 = arith.maximumf %85, %122 : vector<4x1xf32>
      %126 = arith.subf %85, %125 : vector<4x1xf32>
      %127 = math.exp %126 : vector<4x1xf32>
      %128 = arith.subf %122, %125 : vector<4x1xf32>
      %129 = math.exp %128 : vector<4x1xf32>
      %130 = arith.mulf %123, %129 : vector<4x1xf32>
      %131 = arith.addf %127, %130 : vector<4x1xf32>
      %132 = math.log %131 : vector<4x1xf32>
      %133 = arith.addf %125, %132 : vector<4x1xf32>
      %134 = arith.subf %85, %133 : vector<4x1xf32>
      %cst_81 = arith.constant 2.560000e+02 : f32
      %135 = vector.broadcast %cst_81 : f32 to vector<4x1xf32>
      %136 = arith.mulf %135, %133 : vector<4x1xf32>
      %137 = arith.subf %124, %136 : vector<4x1xf32>
      %138 = arith.addf %134, %137 : vector<4x1xf32>
      %cst_82 = arith.constant 0.000000e+00 : f32
      %139 = vector.broadcast %cst_82 : f32 to vector<4x1xf32>
      %140 = arith.subf %139, %134 : vector<4x1xf32>
      %cst_83 = arith.constant 0.899999976 : f32
      %141 = vector.broadcast %cst_83 : f32 to vector<4x1xf32>
      %142 = arith.mulf %141, %140 : vector<4x1xf32>
      %cst_84 = arith.constant 0.000000e+00 : f32
      %143 = vector.broadcast %cst_84 : f32 to vector<4x1xf32>
      %144 = arith.subf %143, %138 : vector<4x1xf32>
      %cst_85 = arith.constant 2.570000e+02 : f32
      %145 = vector.broadcast %cst_85 : f32 to vector<4x1xf32>
      %146 = arith.divf %144, %145 : vector<4x1xf32>
      %cst_86 = arith.constant 1.000000e-01 : f32
      %147 = vector.broadcast %cst_86 : f32 to vector<4x1xf32>
      %148 = arith.mulf %147, %146 : vector<4x1xf32>
      %149 = arith.addf %142, %148 : vector<4x1xf32>
      %150 = arith.cmpf oge, %85, %122 : vector<4x1xf32>
      %151 = arith.extui %150 : vector<4x1xi1> to vector<4x1xi32>
      %152 = arith.sitofp %151 : vector<4x1xi32> to vector<4x1xf32>
      %153 = vector.shape_cast %149 : vector<4x1xf32> to vector<1x4x1xf32>
      %cst_87 = arith.constant dense<0.000000e+00> : vector<1xf32>
      %154 = vector.multi_reduction <add>, %153, %cst_87 [1, 2] : vector<1x4x1xf32> to vector<1xf32>
      %155 = vector.shape_cast %154 : vector<1xf32> to vector<1x1x1xf32>
      %156 = vector.extract %155[0, 0, 0] : f32 from vector<1x1x1xf32>
      %cst_88 = arith.constant 4.000000e+00 : f32
      %157 = arith.divf %156, %cst_88 : f32
      %158 = arith.mulf %116, %152 : vector<4x1xf32>
      %159 = vector.shape_cast %158 : vector<4x1xf32> to vector<1x4x1xf32>
      %cst_89 = arith.constant dense<0.000000e+00> : vector<1xf32>
      %160 = vector.multi_reduction <add>, %159, %cst_89 [1, 2] : vector<1x4x1xf32> to vector<1xf32>
      %161 = vector.shape_cast %160 : vector<1xf32> to vector<1x1x1xf32>
      %162 = vector.extract %161[0, 0, 0] : f32 from vector<1x1x1xf32>
      %163 = arith.subf %80, %85 : vector<4x1xf32>
      %cst_90 = arith.constant 0.000000e+00 : f32
      %164 = vector.broadcast %cst_90 : f32 to vector<4x1xf32>
      %165 = arith.subf %164, %163 : vector<4x1xf32>
      %cst_91 = arith.constant 2.000000e+00 : f32
      %166 = vector.broadcast %cst_91 : f32 to vector<4x1xf32>
      %167 = arith.addf %165, %166 : vector<4x1xf32>
      %cst_92 = arith.constant 0.000000e+00 : f32
      %168 = vector.broadcast %cst_92 : f32 to vector<4x1xf32>
      %169 = arith.maximumf %168, %167 : vector<4x1xf32>
      %c0_93 = arith.constant 0 : index
      %c0_94 = arith.constant 0 : index
      %170 = vector.load %arg19[%c0_93, %c0_94] : memref<4x1xf32, #tpu.memory_space<vmem>>, vector<4x1xf32>
      %171 = arith.addf %169, %170 : vector<4x1xf32>
      %172 = vector.shape_cast %171 : vector<4x1xf32> to vector<1x4x1xf32>
      %cst_95 = arith.constant dense<0.000000e+00> : vector<1xf32>
      %173 = vector.multi_reduction <add>, %172, %cst_95 [1, 2] : vector<1x4x1xf32> to vector<1xf32>
      %174 = vector.shape_cast %173 : vector<1xf32> to vector<1x1x1xf32>
      %175 = vector.extract %174[0, 0, 0] : f32 from vector<1x1x1xf32>
      %cst_96 = arith.constant 1.028000e+03 : f32
      %176 = arith.divf %175, %cst_96 : f32
      %177 = arith.mulf %171, %158 : vector<4x1xf32>
      %178 = vector.shape_cast %177 : vector<4x1xf32> to vector<1x4x1xf32>
      %cst_97 = arith.constant dense<0.000000e+00> : vector<1xf32>
      %179 = vector.multi_reduction <add>, %178, %cst_97 [1, 2] : vector<1x4x1xf32> to vector<1xf32>
      %180 = vector.shape_cast %179 : vector<1xf32> to vector<1x1x1xf32>
      %181 = vector.extract %180[0, 0, 0] : f32 from vector<1x1x1xf32>
      %cst_98 = arith.constant 2.570000e+02 : f32
      %182 = arith.mulf %162, %cst_98 : f32
      %cst_99 = arith.constant 1.000000e+00 : f32
      %183 = arith.maximumf %182, %cst_99 : f32
      %184 = arith.divf %181, %183 : f32
      %cst_100 = arith.constant 0.000000e+00 : f32
      %185 = arith.cmpf ogt, %162, %cst_100 : f32
      %186 = arith.select %185, %184, %176 : f32
      %cst_101 = arith.constant 8.000000e-01 : f32
      %187 = arith.mulf %cst_101, %121 : f32
      %cst_102 = arith.constant 2.000000e-01 : f32
      %188 = arith.mulf %cst_102, %157 : f32
      %189 = arith.addf %187, %188 : f32
      %190 = arith.addf %189, %186 : f32
      %cst_103 = arith.constant 8.000000e-01 : f32
      %191 = vector.broadcast %cst_103 : f32 to vector<4x1xf32>
      %192 = arith.mulf %191, %80 : vector<4x1xf32>
      %cst_104 = arith.constant 2.000000e-01 : f32
      %193 = vector.broadcast %cst_104 : f32 to vector<4x1xf32>
      %194 = arith.mulf %193, %85 : vector<4x1xf32>
      %195 = arith.addf %192, %194 : vector<4x1xf32>
      %c0_105 = arith.constant 0 : index
      %c0_106 = arith.constant 0 : index
      %196 = vector.load %arg18[%c0_105, %c0_106] : memref<4x1xf32, #tpu.memory_space<vmem>>, vector<4x1xf32>
      %197 = arith.cmpf oge, %195, %196 : vector<4x1xf32>
      %198 = arith.extui %197 : vector<4x1xi1> to vector<4x1xi32>
      %199 = arith.sitofp %198 : vector<4x1xi32> to vector<4x1xf32>
      %200 = vector.shape_cast %199 : vector<4x1xf32> to vector<1x4x1xf32>
      %cst_107 = arith.constant dense<0.000000e+00> : vector<1xf32>
      %201 = vector.multi_reduction <add>, %200, %cst_107 [1, 2] : vector<1x4x1xf32> to vector<1xf32>
      %202 = vector.shape_cast %201 : vector<1xf32> to vector<1x1x1xf32>
      %203 = vector.extract %202[0, 0, 0] : f32 from vector<1x1x1xf32>
      %cst_108 = arith.constant 4.000000e+00 : f32
      %204 = arith.divf %203, %cst_108 : f32
      %cst_109 = arith.constant 1.000000e+02 : f32
      %205 = arith.mulf %cst_109, %204 : f32
      %cst_110 = arith.constant dense<0.000000e+00> : vector<128xf32>
      %206 = vector.multi_reduction <add>, %73, %cst_110 [0] : vector<4x128xf32> to vector<128xf32>
      %207 = vector.shape_cast %206 : vector<128xf32> to vector<1x128xf32>
      %cst_111 = arith.constant 4.000000e+00 : f32
      %208 = vector.broadcast %cst_111 : f32 to vector<1x128xf32>
      %209 = arith.divf %207, %208 : vector<1x128xf32>
      %210 = vector.broadcast %209 : vector<1x128xf32> to vector<4x128xf32>
      %211 = arith.subf %73, %210 : vector<4x128xf32>
      %212 = vector.broadcast %209 : vector<1x128xf32> to vector<4x128xf32>
      %213 = arith.subf %73, %212 : vector<4x128xf32>
      %214 = arith.mulf %211, %213 : vector<4x128xf32>
      %cst_112 = arith.constant dense<0.000000e+00> : vector<128xf32>
      %215 = vector.multi_reduction <add>, %214, %cst_112 [0] : vector<4x128xf32> to vector<128xf32>
      %216 = vector.shape_cast %215 : vector<128xf32> to vector<1x128xf32>
      %cst_113 = arith.constant 3.000000e+00 : f32
      %217 = vector.broadcast %cst_113 : f32 to vector<1x128xf32>
      %218 = arith.divf %216, %217 : vector<1x128xf32>
      %219 = math.sqrt %218 : vector<1x128xf32>
      %220 = vector.shape_cast %219 : vector<1x128xf32> to vector<1x1x128xf32>
      %cst_114 = arith.constant dense<0.000000e+00> : vector<1xf32>
      %221 = vector.multi_reduction <add>, %220, %cst_114 [1, 2] : vector<1x1x128xf32> to vector<1xf32>
      %222 = vector.shape_cast %221 : vector<1xf32> to vector<1x1x1xf32>
      %223 = vector.extract %222[0, 0, 0] : f32 from vector<1x1x1xf32>
      %cst_115 = arith.constant 1.280000e+02 : f32
      %224 = arith.divf %223, %cst_115 : f32
      %cst_116 = arith.constant dense<0.000000e+00> : vector<128xf32>
      %225 = vector.multi_reduction <add>, %75, %cst_116 [0] : vector<4x128xf32> to vector<128xf32>
      %226 = vector.shape_cast %225 : vector<128xf32> to vector<1x128xf32>
      %cst_117 = arith.constant 4.000000e+00 : f32
      %227 = vector.broadcast %cst_117 : f32 to vector<1x128xf32>
      %228 = arith.divf %226, %227 : vector<1x128xf32>
      %229 = vector.broadcast %228 : vector<1x128xf32> to vector<4x128xf32>
      %230 = arith.subf %75, %229 : vector<4x128xf32>
      %231 = vector.broadcast %228 : vector<1x128xf32> to vector<4x128xf32>
      %232 = arith.subf %75, %231 : vector<4x128xf32>
      %233 = arith.mulf %230, %232 : vector<4x128xf32>
      %cst_118 = arith.constant dense<0.000000e+00> : vector<128xf32>
      %234 = vector.multi_reduction <add>, %233, %cst_118 [0] : vector<4x128xf32> to vector<128xf32>
      %235 = vector.shape_cast %234 : vector<128xf32> to vector<1x128xf32>
      %cst_119 = arith.constant 3.000000e+00 : f32
      %236 = vector.broadcast %cst_119 : f32 to vector<1x128xf32>
      %237 = arith.divf %235, %236 : vector<1x128xf32>
      %238 = math.sqrt %237 : vector<1x128xf32>
      %239 = vector.shape_cast %238 : vector<1x128xf32> to vector<1x1x128xf32>
      %cst_120 = arith.constant dense<0.000000e+00> : vector<1xf32>
      %240 = vector.multi_reduction <add>, %239, %cst_120 [1, 2] : vector<1x1x128xf32> to vector<1xf32>
      %241 = vector.shape_cast %240 : vector<1xf32> to vector<1x1x1xf32>
      %242 = vector.extract %241[0, 0, 0] : f32 from vector<1x1x1xf32>
      %cst_121 = arith.constant 1.280000e+02 : f32
      %243 = arith.divf %242, %cst_121 : f32
      %cst_122 = arith.constant dense<0.000000e+00> : vector<128xf32>
      %244 = vector.multi_reduction <add>, %74, %cst_122 [0] : vector<4x128xf32> to vector<128xf32>
      %245 = vector.shape_cast %244 : vector<128xf32> to vector<1x128xf32>
      %cst_123 = arith.constant 4.000000e+00 : f32
      %246 = vector.broadcast %cst_123 : f32 to vector<1x128xf32>
      %247 = arith.divf %245, %246 : vector<1x128xf32>
      %248 = vector.broadcast %247 : vector<1x128xf32> to vector<4x128xf32>
      %249 = arith.subf %74, %248 : vector<4x128xf32>
      %250 = vector.broadcast %247 : vector<1x128xf32> to vector<4x128xf32>
      %251 = arith.subf %74, %250 : vector<4x128xf32>
      %252 = arith.mulf %249, %251 : vector<4x128xf32>
      %cst_124 = arith.constant dense<0.000000e+00> : vector<128xf32>
      %253 = vector.multi_reduction <add>, %252, %cst_124 [0] : vector<4x128xf32> to vector<128xf32>
      %254 = vector.shape_cast %253 : vector<128xf32> to vector<1x128xf32>
      %cst_125 = arith.constant 3.000000e+00 : f32
      %255 = vector.broadcast %cst_125 : f32 to vector<1x128xf32>
      %256 = arith.divf %254, %255 : vector<1x128xf32>
      %257 = math.sqrt %256 : vector<1x128xf32>
      %258 = vector.shape_cast %257 : vector<1x128xf32> to vector<1x1x128xf32>
      %cst_126 = arith.constant dense<0.000000e+00> : vector<1xf32>
      %259 = vector.multi_reduction <add>, %258, %cst_126 [1, 2] : vector<1x1x128xf32> to vector<1xf32>
      %260 = vector.shape_cast %259 : vector<1xf32> to vector<1x1x1xf32>
      %261 = vector.extract %260[0, 0, 0] : f32 from vector<1x1x1xf32>
      %cst_127 = arith.constant 1.280000e+02 : f32
      %262 = arith.divf %261, %cst_127 : f32
      %263 = tpu.iota {dimensions = array<i32: 1>} : vector<1x128xi32>
      %cst_128 = arith.constant 0.000000e+00 : f32
      %264 = vector.broadcast %cst_128 : f32 to vector<1x128xf32>
      %c0_i32_129 = arith.constant 0 : i32
      %265 = vector.broadcast %c0_i32_129 : i32 to vector<1x128xi32>
      %266 = arith.cmpi eq, %263, %265 : vector<1x128xi32>
      %267 = arith.extui %266 : vector<1x128xi1> to vector<1x128xi32>
      %268 = arith.sitofp %267 : vector<1x128xi32> to vector<1x128xf32>
      %269 = vector.broadcast %190 : f32 to vector<1x128xf32>
      %270 = arith.mulf %268, %269 : vector<1x128xf32>
      %271 = arith.addf %264, %270 : vector<1x128xf32>
      %c1_i32_130 = arith.constant 1 : i32
      %272 = vector.broadcast %c1_i32_130 : i32 to vector<1x128xi32>
      %273 = arith.cmpi eq, %263, %272 : vector<1x128xi32>
      %274 = arith.extui %273 : vector<1x128xi1> to vector<1x128xi32>
      %275 = arith.sitofp %274 : vector<1x128xi32> to vector<1x128xf32>
      %276 = vector.broadcast %121 : f32 to vector<1x128xf32>
      %277 = arith.mulf %275, %276 : vector<1x128xf32>
      %278 = arith.addf %271, %277 : vector<1x128xf32>
      %c2_i32 = arith.constant 2 : i32
      %279 = vector.broadcast %c2_i32 : i32 to vector<1x128xi32>
      %280 = arith.cmpi eq, %263, %279 : vector<1x128xi32>
      %281 = arith.extui %280 : vector<1x128xi1> to vector<1x128xi32>
      %282 = arith.sitofp %281 : vector<1x128xi32> to vector<1x128xf32>
      %283 = vector.broadcast %157 : f32 to vector<1x128xf32>
      %284 = arith.mulf %282, %283 : vector<1x128xf32>
      %285 = arith.addf %278, %284 : vector<1x128xf32>
      %c3_i32 = arith.constant 3 : i32
      %286 = vector.broadcast %c3_i32 : i32 to vector<1x128xi32>
      %287 = arith.cmpi eq, %263, %286 : vector<1x128xi32>
      %288 = arith.extui %287 : vector<1x128xi1> to vector<1x128xi32>
      %289 = arith.sitofp %288 : vector<1x128xi32> to vector<1x128xf32>
      %290 = vector.broadcast %186 : f32 to vector<1x128xf32>
      %291 = arith.mulf %289, %290 : vector<1x128xf32>
      %292 = arith.addf %285, %291 : vector<1x128xf32>
      %c4_i32 = arith.constant 4 : i32
      %293 = vector.broadcast %c4_i32 : i32 to vector<1x128xi32>
      %294 = arith.cmpi eq, %263, %293 : vector<1x128xi32>
      %295 = arith.extui %294 : vector<1x128xi1> to vector<1x128xi32>
      %296 = arith.sitofp %295 : vector<1x128xi32> to vector<1x128xf32>
      %297 = vector.broadcast %205 : f32 to vector<1x128xf32>
      %298 = arith.mulf %296, %297 : vector<1x128xf32>
      %299 = arith.addf %292, %298 : vector<1x128xf32>
      %c5_i32 = arith.constant 5 : i32
      %300 = vector.broadcast %c5_i32 : i32 to vector<1x128xi32>
      %301 = arith.cmpi eq, %263, %300 : vector<1x128xi32>
      %302 = arith.extui %301 : vector<1x128xi1> to vector<1x128xi32>
      %303 = arith.sitofp %302 : vector<1x128xi32> to vector<1x128xf32>
      %304 = vector.broadcast %224 : f32 to vector<1x128xf32>
      %305 = arith.mulf %303, %304 : vector<1x128xf32>
      %306 = arith.addf %299, %305 : vector<1x128xf32>
      %c6_i32 = arith.constant 6 : i32
      %307 = vector.broadcast %c6_i32 : i32 to vector<1x128xi32>
      %308 = arith.cmpi eq, %263, %307 : vector<1x128xi32>
      %309 = arith.extui %308 : vector<1x128xi1> to vector<1x128xi32>
      %310 = arith.sitofp %309 : vector<1x128xi32> to vector<1x128xf32>
      %311 = vector.broadcast %243 : f32 to vector<1x128xf32>
      %312 = arith.mulf %310, %311 : vector<1x128xf32>
      %313 = arith.addf %306, %312 : vector<1x128xf32>
      %c7_i32 = arith.constant 7 : i32
      %314 = vector.broadcast %c7_i32 : i32 to vector<1x128xi32>
      %315 = arith.cmpi eq, %263, %314 : vector<1x128xi32>
      %316 = arith.extui %315 : vector<1x128xi1> to vector<1x128xi32>
      %317 = arith.sitofp %316 : vector<1x128xi32> to vector<1x128xf32>
      %318 = vector.broadcast %262 : f32 to vector<1x128xf32>
      %319 = arith.mulf %317, %318 : vector<1x128xf32>
      %320 = arith.addf %313, %319 : vector<1x128xf32>
      %c0_131 = arith.constant 0 : index
      %c0_132 = arith.constant 0 : index
      %321 = vector.load %arg9[%c0_131, %c0_132] : memref<1x128xf32, #tpu.memory_space<vmem>>, vector<1x128xf32>
      tpu.vector_store %arg9[%c0_131, %c0_132], %320 {strides = array<i32>} : memref<1x128xf32, #tpu.memory_space<vmem>>, vector<1x128xf32>,
    } else {
    }
    return
  }
  func.func @transform_0(%arg0: i32) -> (i32, i32) {
    %c0_i32 = arith.constant 0 : i32
    %c0_i32_0 = arith.constant 0 : i32
    %c0_i32_1 = arith.constant 0 : i32
    return %c0_i32, %c0_i32_0 : i32, i32
  }
  func.func @transform_1(%arg0: i32) -> (i32, i32) {
    %c0_i32 = arith.constant 0 : i32
    %c0_i32_0 = arith.constant 0 : i32
    %c0_i32_1 = arith.constant 0 : i32
    return %c0_i32, %c0_i32_0 : i32, i32
  }
  func.func @transform_2(%arg0: i32) -> (i32, i32) {
    %c0_i32 = arith.constant 0 : i32
    %c0_i32_0 = arith.constant 0 : i32
    %c0_i32_1 = arith.constant 0 : i32
    return %c0_i32, %c0_i32_0 : i32, i32
  }
  func.func @transform_3(%arg0: i32) -> (i32, i32) {
    %c0_i32 = arith.constant 0 : i32
    %c0_i32_0 = arith.constant 0 : i32
    %c0_i32_1 = arith.constant 0 : i32
    return %c0_i32, %c0_i32_0 : i32, i32
  }
  func.func @transform_4(%arg0: i32) -> (i32, i32) {
    %c0_i32 = arith.constant 0 : i32
    %c0_i32_0 = arith.constant 0 : i32
    %c0_i32_1 = arith.constant 0 : i32
    return %c0_i32, %c0_i32_0 : i32, i32
  }
  func.func @transform_5(%arg0: i32) -> (i32, i32) {
    %c0_i32 = arith.constant 0 : i32
    %c0_i32_0 = arith.constant 0 : i32
    %c0_i32_1 = arith.constant 0 : i32
    return %c0_i32, %c0_i32_0 : i32, i32
  }
  func.func @transform_6(%arg0: i32) -> (i32, i32) {
    %c0_i32 = arith.constant 0 : i32
    %c0_i32_0 = arith.constant 0 : i32
    %c0_i32_1 = arith.constant 0 : i32
    return %c0_i32, %c0_i32_0 : i32, i32
  }
  func.func @transform_7(%arg0: i32) -> (i32, i32) {
    %c0_i32 = arith.constant 0 : i32
    %c0_i32_0 = arith.constant 0 : i32
    return %c0_i32, %arg0 : i32, i32
  }
  func.func @transform_8(%arg0: i32) -> (i32, i32) {
    %c0_i32 = arith.constant 0 : i32
    %c0_i32_0 = arith.constant 0 : i32
    %c0_i32_1 = arith.constant 0 : i32
    return %c0_i32, %c0_i32_0 : i32, i32
  }
}

</mosaic_0001>

<llo_original>
// kernel: tpu_custom_call.1
$region0: #{tpu_custom_call.1}
  #allocation0 [shape = 'u32[]', space=smem, size = 0x4, offset = 0x4, fixed_abs, tag = 'smem constant byte address 0x4 - core index']
  #allocation1 [shape = 'u32[144,128]{1,0:T(1,128)}', space=vmem, size = 0x12000, scoped, tag = 'internal scratch']
  #allocation2 [shape = 'f32[16,128]{1,0:T(8,128)}', space=vmem, size = 0x2000, scoped, tag = 'scratch operand']
  #allocation3 [shape = 'f32[4,128]{1,0:T(4,128)}', space=vmem, size = 0x800, scoped, tag = 'scratch operand']
  #allocation4 [shape = 'f32[4,1]{1,0:T(4,128)}', space=vmem, size = 0x800, scoped, tag = 'scratch operand']
  #allocation5 [shape = 'f32[4,1]{1,0:T(4,128)}', space=vmem, size = 0x800, scoped, tag = 'scratch operand']
  #allocation6 [shape = 'f32[4,1]{1,0:T(4,128)}', space=vmem, size = 0x800, scoped, tag = 'scratch operand']
  #allocation7 [shape = 'f32[4,1]{1,0:T(4,128)}', space=vmem, size = 0x800, scoped, tag = 'scratch operand']
  #allocation8 [shape = 'f32[4,1]{1,0:T(4,128)}', space=vmem, size = 0x800, scoped, tag = 'scratch operand']
  #allocation9 [shape = 'f32[4,1]{1,0:T(4,128)}', space=vmem, size = 0x800, scoped, tag = 'scratch operand']
  #allocation10 [shape = 'f32[4,1]{1,0:T(4,128)}', space=vmem, size = 0x800, scoped, tag = 'scratch operand']
  #allocation11 [shape = 'f32[4,1]{1,0:T(4,128)}', space=vmem, size = 0x800, scoped, tag = 'scratch operand']
  %s0 = inlined_call_operand.vmem [shape: s32[96,1], index: 0, kind: input, shape index: {}]
  %s1 = inlined_call_operand.vmem [shape: f32[1,96], index: 1, kind: input, shape index: {}]
  %s2 = inlined_call_operand.vmem [shape: f32[64,128], index: 2, kind: input, shape index: {}]
  %s3 = inlined_call_operand.hbm [shape: f32[128,128], index: 3, kind: input, shape index: {}]
  %s4 = inlined_call_operand.vmem [shape: f32[1,128], index: 4, kind: input, shape index: {}]
  %s5 = inlined_call_operand.hbm [shape: f32[128,128], index: 5, kind: input, shape index: {}]
  %s6 = inlined_call_operand.vmem [shape: f32[1,128], index: 6, kind: input, shape index: {}]
  %s7 = inlined_call_operand.hbm [shape: f32[128,256], index: 7, kind: input, shape index: {}]
  %s8 = inlined_call_operand.hbm [shape: f32[1,128], index: 8, kind: output, shape index: {}]
  %s9 = sld [smem:[#allocation0]]
  $region85: #{tpu_custom_call.1} parent=0
    _
  %s11 = ssub.s32 1, %s9
  %s12 = scalar_select 0, %s11, %s9
  $region1: #{tpu_custom_call.1} parent=0
    #allocation12 [shape = 'u8[65536]{0}', space=vmem, size = 0x10000, scoped, tag = 'input window, operand 3, single buffered']
    #allocation13 [shape = 's32[2]{0}', space=sflag, size = 0x8, scoped, tag = 'scoped memory for tpu_custom_call.1']
    #allocation14 [shape = 's32[2]{0}', space=sflag, size = 0x8, scoped, tag = 'scoped memory for tpu_custom_call.1']
    #allocation15 [shape = 'u8[65536]{0}', space=vmem, size = 0x10000, scoped, tag = 'input window, operand 5, single buffered']
    #allocation16 [shape = 's32[1]{0}', space=sflag, size = 0x4, scoped, tag = 'scoped memory for tpu_custom_call.1']
    #allocation17 [shape = 'u8[131072]{0}', space=vmem, size = 0x20000, scoped, tag = 'input window, operand 7']
    #allocation18 [shape = 'u8[512]{0}', space=vmem, size = 0x400, scoped, tag = 'output window, operand 0, single buffered']
    %13 = vsyncpa [#allocation13], 0
    %14 = vsyncpa [#allocation16], 0
    %15 = vsyncpa [#allocation14], 0
    loop: start=0, step=1, limit=4
    $region2: #{tpu_custom_call.1} parent=1 // loop_pre_header
      _
    $region3: #{tpu_custom_call.1} parent=1 // loop_header
      %s17 = sphi 0, %s21
      %p18 = scmp.ge.s32.totalorder %s17, 4
      %s25 = sphi 0, %s25
      %s27 = sphi 0, %s25
      %s28 = sphi 0, %s27
      %s42 = sphi 0, %s28
      %s46 = sphi 0, %s46
      %s48 = sphi 0, %s46
      %s49 = sphi 0, %s48
      %s63 = sphi 0, %s49
      %s67 = sphi 0, %s67
      %s69 = sphi 0, %s67
      %s70 = sphi 0, %s69
      %s84 = sphi 0, %s70
      %s88 = sphi 0, %s88
      %s90 = sphi 0, %s88
      %s91 = sphi 0, %s90
      %s105 = sphi 0, %s91
      %s109 = sphi 0, %s109
      %s111 = sphi 0, %s109
      %s112 = sphi 0, %s111
      %s126 = sphi 0, %s112
      %s130 = sphi 0, %s130
      %s132 = sphi 0, %s130
      %s133 = sphi 0, %s132
      %s147 = sphi 0, %s133
      %s151 = sphi 0, %s151
      %s153 = sphi 0, %s151
      %s154 = sphi 0, %s153
      %s168 = sphi 0, %s154
      %s174 = sphi 0, %s176
      %s177 = sphi 0, %s174
      %s178 = sphi 0, %s177
      %s194 = sphi 0, %s178
      %s198 = sphi 0, %s198
      %s200 = sphi 0, %s198
      %s201 = sphi 0, %s200
      %s215 = sphi 0, %s201
    $region4: #{tpu_custom_call.1} parent=1 // loop_header_branch
      %20 = sbr.rel (%p18) target = $region8
    $region5: #{tpu_custom_call.1} parent=1 // loop_body
      %s22 = ssub.s32 %s17, 1
      %s23 = ssub.s32 %s17, 2
      %s24 = sadd.s32 %s17, 1
      %s26 = sadd.s32 %s25, 1
      %p29 = scmp.eq.s32.totalorder %s17, 1
      %p30 = scmp.ne.s32.totalorder %s25, %s27
      %p31 = scmp.eq.s32.totalorder %s17, 0
      %p32 = por %p30, %p31
      %p33 = scmp.ne.s32.totalorder %s25, %s27
      %p34 = scmp.eq.s32.totalorder %s22, 1
      %p35 = por %p33, %p34
      %p36 = scmp.ne.s32.totalorder %s27, %s28
      %p37 = scmp.eq.s32.totalorder %s22, 0
      %p38 = por %p36, %p37
      %p39 = scmp.ne.s32.totalorder %s27, %s28
      %p40 = scmp.eq.s32.totalorder %s23, 1
      %p41 = por %p39, %p40
      %p43 = scmp.ne.s32.totalorder %s28, %s42
      %p44 = scmp.eq.s32.totalorder %s23, 0
      %p45 = por %p43, %p44
      %s47 = sadd.s32 %s46, 1
      %p50 = scmp.eq.s32.totalorder %s17, 1
      %p51 = scmp.ne.s32.totalorder %s46, %s48
      %p52 = scmp.eq.s32.totalorder %s17, 0
      %p53 = por %p51, %p52
      %p54 = scmp.ne.s32.totalorder %s46, %s48
      %p55 = scmp.eq.s32.totalorder %s22, 1
      %p56 = por %p54, %p55
      %p57 = scmp.ne.s32.totalorder %s48, %s49
      %p58 = scmp.eq.s32.totalorder %s22, 0
      %p59 = por %p57, %p58
      %p60 = scmp.ne.s32.totalorder %s48, %s49
      %p61 = scmp.eq.s32.totalorder %s23, 1
      %p62 = por %p60, %p61
      %p64 = scmp.ne.s32.totalorder %s49, %s63
      %p65 = scmp.eq.s32.totalorder %s23, 0
      %p66 = por %p64, %p65
      %s68 = sadd.s32 %s67, 1
      %p71 = scmp.eq.s32.totalorder %s17, 1
      %p72 = scmp.ne.s32.totalorder %s67, %s69
      %p73 = scmp.eq.s32.totalorder %s17, 0
      %p74 = por %p72, %p73
      %p75 = scmp.ne.s32.totalorder %s67, %s69
      %p76 = scmp.eq.s32.totalorder %s22, 1
      %p77 = por %p75, %p76
      %p78 = scmp.ne.s32.totalorder %s69, %s70
      %p79 = scmp.eq.s32.totalorder %s22, 0
      %p80 = por %p78, %p79
      %p81 = scmp.ne.s32.totalorder %s69, %s70
      %p82 = scmp.eq.s32.totalorder %s23, 1
      %p83 = por %p81, %p82
      %p85 = scmp.ne.s32.totalorder %s70, %s84
      %p86 = scmp.eq.s32.totalorder %s23, 0
      %p87 = por %p85, %p86
      %s89 = sadd.s32 %s88, 1
      %p92 = scmp.eq.s32.totalorder %s17, 1
      %p93 = scmp.ne.s32.totalorder %s88, %s90
      %p94 = scmp.eq.s32.totalorder %s17, 0
      %p95 = por %p93, %p94
      %p96 = scmp.ne.s32.totalorder %s88, %s90
      %p97 = scmp.eq.s32.totalorder %s22, 1
      %p98 = por %p96, %p97
      %p99 = scmp.ne.s32.totalorder %s90, %s91
      %p100 = scmp.eq.s32.totalorder %s22, 0
      %p101 = por %p99, %p100
      %p102 = scmp.ne.s32.totalorder %s90, %s91
      %p103 = scmp.eq.s32.totalorder %s23, 1
      %p104 = por %p102, %p103
      %p106 = scmp.ne.s32.totalorder %s91, %s105
      %p107 = scmp.eq.s32.totalorder %s23, 0
      %p108 = por %p106, %p107
      %s110 = sadd.s32 %s109, 1
      %p113 = scmp.eq.s32.totalorder %s17, 1
      %p114 = scmp.ne.s32.totalorder %s109, %s111
      %p115 = scmp.eq.s32.totalorder %s17, 0
      %p116 = por %p114, %p115
      %p117 = scmp.ne.s32.totalorder %s109, %s111
      %p118 = scmp.eq.s32.totalorder %s22, 1
      %p119 = por %p117, %p118
      %p120 = scmp.ne.s32.totalorder %s111, %s112
      %p121 = scmp.eq.s32.totalorder %s22, 0
      %p122 = por %p120, %p121
      %p123 = scmp.ne.s32.totalorder %s111, %s112
      %p124 = scmp.eq.s32.totalorder %s23, 1
      %p125 = por %p123, %p124
      %p127 = scmp.ne.s32.totalorder %s112, %s126
      %p128 = scmp.eq.s32.totalorder %s23, 0
      %p129 = por %p127, %p128
      %s131 = sadd.s32 %s130, 1
      %p134 = scmp.eq.s32.totalorder %s17, 1
      %p135 = scmp.ne.s32.totalorder %s130, %s132
      %p136 = scmp.eq.s32.totalorder %s17, 0
      %p137 = por %p135, %p136
      %p138 = scmp.ne.s32.totalorder %s130, %s132
      %p139 = scmp.eq.s32.totalorder %s22, 1
      %p140 = por %p138, %p139
      %p141 = scmp.ne.s32.totalorder %s132, %s133
      %p142 = scmp.eq.s32.totalorder %s22, 0
      %p143 = por %p141, %p142
      %p144 = scmp.ne.s32.totalorder %s132, %s133
      %p145 = scmp.eq.s32.totalorder %s23, 1
      %p146 = por %p144, %p145
      %p148 = scmp.ne.s32.totalorder %s133, %s147
      %p149 = scmp.eq.s32.totalorder %s23, 0
      %p150 = por %p148, %p149
      %s152 = sadd.s32 %s151, 1
      %p155 = scmp.eq.s32.totalorder %s17, 1
      %p156 = scmp.ne.s32.totalorder %s151, %s153
      %p157 = scmp.eq.s32.totalorder %s17, 0
      %p158 = por %p156, %p157
      %p159 = scmp.ne.s32.totalorder %s151, %s153
      %p160 = scmp.eq.s32.totalorder %s22, 1
      %p161 = por %p159, %p160
      %p162 = scmp.ne.s32.totalorder %s153, %s154
      %p163 = scmp.eq.s32.totalorder %s22, 0
      %p164 = por %p162, %p163
      %p165 = scmp.ne.s32.totalorder %s153, %s154
      %p166 = scmp.eq.s32.totalorder %s23, 1
      %p167 = por %p165, %p166
      %p169 = scmp.ne.s32.totalorder %s154, %s168
      %p170 = scmp.eq.s32.totalorder %s23, 0
      %p171 = por %p169, %p170
      %s172 = ssub.s32 %s17, %s24
      %p173 = scmp.eq.s32.totalorder %s172, 0
      %s175 = sadd.s32 %s174, 1
      %s176 = scalar_select %p173, %s174, %s175
      %p179 = pneg %p173
      %p180 = scmp.eq.s32.totalorder %s17, 1
      %p181 = por %p179, %p180
      %p182 = scmp.ne.s32.totalorder %s174, %s177
      %p183 = scmp.eq.s32.totalorder %s17, 0
      %p184 = por %p182, %p183
      %p185 = scmp.ne.s32.totalorder %s174, %s177
      %p186 = scmp.eq.s32.totalorder %s22, 1
      %p187 = por %p185, %p186
      %p188 = scmp.ne.s32.totalorder %s177, %s178
      %p189 = scmp.eq.s32.totalorder %s22, 0
      %p190 = por %p188, %p189
      %p191 = scmp.ne.s32.totalorder %s177, %s178
      %p192 = scmp.eq.s32.totalorder %s23, 1
      %p193 = por %p191, %p192
      %p195 = scmp.ne.s32.totalorder %s178, %s194
      %p196 = scmp.eq.s32.totalorder %s23, 0
      %p197 = por %p195, %p196
      %s199 = sadd.s32 %s198, 1
      %p202 = scmp.eq.s32.totalorder %s17, 1
      %p203 = scmp.ne.s32.totalorder %s198, %s200
      %p204 = scmp.eq.s32.totalorder %s17, 0
      %p205 = por %p203, %p204
      %p206 = scmp.ne.s32.totalorder %s198, %s200
      %p207 = scmp.eq.s32.totalorder %s22, 1
      %p208 = por %p206, %p207
      %p209 = scmp.ne.s32.totalorder %s200, %s201
      %p210 = scmp.eq.s32.totalorder %s22, 0
      %p211 = por %p209, %p210
      %p212 = scmp.ne.s32.totalorder %s200, %s201
      %p213 = scmp.eq.s32.totalorder %s23, 1
      %p214 = por %p212, %p213
      %p216 = scmp.ne.s32.totalorder %s201, %s215
      %p217 = scmp.eq.s32.totalorder %s23, 0
      %p218 = por %p216, %p217
      %p219 = scmp.le.s32.totalorder 1, %s17
      %p220 = scmp.lt.s32.totalorder %s17, 3
      %p221 = pnand %p219, %p220
      %p222 = pneg %p221
      // Predicated region
      $region9: #{tpu_custom_call.1} parent=5 // pred_check
        _
      $region10: #{tpu_custom_call.1} parent=5 // pred_check_branch
        %224 = sbr.rel (%p221) target = $region12
      $region11: #{tpu_custom_call.1} parent=5 // pred_region
        %s225 = ssub.s32 %s17, 1
        // Predicated region
        $region13: #{tpu_custom_call.1} parent=11 // pred_check
          %p226 = pneg %p38
        $region14: #{tpu_custom_call.1} parent=11 // pred_check_branch
          %228 = sbr.rel (%p226) target = $region16
        $region15: #{tpu_custom_call.1} parent=11 // pred_region
          _
        $region16: #{tpu_custom_call.1} parent=11 // pred_fallthru
          _
        // Predicated region
        $region17: #{tpu_custom_call.1} parent=11 // pred_check
          %p229 = pneg %p59
        $region18: #{tpu_custom_call.1} parent=11 // pred_check_branch
          %231 = sbr.rel (%p229) target = $region20
        $region19: #{tpu_custom_call.1} parent=11 // pred_region
          _
        $region20: #{tpu_custom_call.1} parent=11 // pred_fallthru
          _
        // Predicated region
        $region21: #{tpu_custom_call.1} parent=11 // pred_check
          %p232 = pneg %p80
        $region22: #{tpu_custom_call.1} parent=11 // pred_check_branch
          %234 = sbr.rel (%p232) target = $region24
        $region23: #{tpu_custom_call.1} parent=11 // pred_region
          _
        $region24: #{tpu_custom_call.1} parent=11 // pred_fallthru
          _
        // Predicated region
        $region25: #{tpu_custom_call.1} parent=11 // pred_check
          %p235 = pneg %p101
        $region26: #{tpu_custom_call.1} parent=11 // pred_check_branch
          %237 = sbr.rel (%p235) target = $region28
        $region27: #{tpu_custom_call.1} parent=11 // pred_region
          %s239 = ssub.s32 2048, 2048
          %240 = vsyncadd [#allocation13], %s239
          %s241 = sshll.u32 [#allocation12], 4
          %s242 = int_to_ptr.vmem [resolvable:$true] %s241
          %247 = dma.hbm_to_vmem [thread:$0]  %s3, 2048, %s242, [#allocation13], 128, 128, 8
        $region28: #{tpu_custom_call.1} parent=11 // pred_fallthru
          _
        // Predicated region
        $region29: #{tpu_custom_call.1} parent=11 // pred_check
          %p248 = pneg %p122
        $region30: #{tpu_custom_call.1} parent=11 // pred_check_branch
          %250 = sbr.rel (%p248) target = $region32
        $region31: #{tpu_custom_call.1} parent=11 // pred_region
          _
        $region32: #{tpu_custom_call.1} parent=11 // pred_fallthru
          _
        // Predicated region
        $region33: #{tpu_custom_call.1} parent=11 // pred_check
          %p251 = pneg %p143
        $region34: #{tpu_custom_call.1} parent=11 // pred_check_branch
          %253 = sbr.rel (%p251) target = $region36
        $region35: #{tpu_custom_call.1} parent=11 // pred_region
          %s255 = ssub.s32 2048, 2048
          %256 = vsyncadd [#allocation16], %s255
          %s257 = sshll.u32 [#allocation15], 4
          %s258 = int_to_ptr.vmem [resolvable:$true] %s257
          %263 = dma.hbm_to_vmem [thread:$0]  %s5, 2048, %s258, [#allocation16], 128, 128, 8
        $region36: #{tpu_custom_call.1} parent=11 // pred_fallthru
          _
        // Predicated region
        $region37: #{tpu_custom_call.1} parent=11 // pred_check
          %p264 = pneg %p164
        $region38: #{tpu_custom_call.1} parent=11 // pred_check_branch
          %266 = sbr.rel (%p264) target = $region40
        $region39: #{tpu_custom_call.1} parent=11 // pred_region
          _
        $region40: #{tpu_custom_call.1} parent=11 // pred_fallthru
          _
      $region12: #{tpu_custom_call.1} parent=5 // pred_fallthru
        _
      %p267 = scmp.lt.s32.totalorder %s17, 2
      // Predicated region
      $region41: #{tpu_custom_call.1} parent=5 // pred_check
        %p268 = pneg %p267
      $region42: #{tpu_custom_call.1} parent=5 // pred_check_branch
        %270 = sbr.rel (%p268) target = $region44
      $region43: #{tpu_custom_call.1} parent=5 // pred_region
        // Predicated region
        $region45: #{tpu_custom_call.1} parent=43 // pred_check
          %p271 = pneg %p184
        $region46: #{tpu_custom_call.1} parent=43 // pred_check_branch
          %273 = sbr.rel (%p271) target = $region48
        $region47: #{tpu_custom_call.1} parent=43 // pred_region
          %s274 = sand.u32 %s17, 1
          %s275 = scalar_lea.sflag [#allocation13], %s274
          %s276 = sand.u32 %s174, 1
          %s277 = smul.addr %s276, 128
          %s278 = scalar_lea.vmem [#allocation17], %s277
          %s280 = ssub.s32 2048, 2048
          %281 = vsyncadd %s275, %s280
          %s282 = smul.addr %s17, 128
          %s283 = scalar_lea.hbm %s7, %s282
          %s284 = sshll.u32 %s278, 4
          %s285 = int_to_ptr.vmem [resolvable:$true] %s284
          %290 = dma.hbm_to_vmem [thread:$0]  %s283, 2048, %s285, %s275, 256, 128, 8
        $region48: #{tpu_custom_call.1} parent=43 // pred_fallthru
          _
      $region44: #{tpu_custom_call.1} parent=5 // pred_fallthru
        _
      %p291 = scmp.le.s32.totalorder 1, %s17
      %p292 = scmp.lt.s32.totalorder %s17, 3
      %p293 = pnand %p291, %p292
      %p294 = pneg %p293
      // Predicated region
      $region49: #{tpu_custom_call.1} parent=5 // pred_check
        _
      $region50: #{tpu_custom_call.1} parent=5 // pred_check_branch
        %296 = sbr.rel (%p293) target = $region52
      $region51: #{tpu_custom_call.1} parent=5 // pred_region
        %s297 = ssub.s32 %s17, 1
        // Predicated region
        $region53: #{tpu_custom_call.1} parent=51 // pred_check
          %p298 = pneg %p101
        $region54: #{tpu_custom_call.1} parent=51 // pred_check_branch
          %300 = sbr.rel (%p298) target = $region56
        $region55: #{tpu_custom_call.1} parent=51 // pred_region
          %301 = dma.done [#allocation13], 2048
        $region56: #{tpu_custom_call.1} parent=51 // pred_fallthru
          _
        // Predicated region
        $region57: #{tpu_custom_call.1} parent=51 // pred_check
          %p302 = pneg %p143
        $region58: #{tpu_custom_call.1} parent=51 // pred_check_branch
          %304 = sbr.rel (%p302) target = $region60
        $region59: #{tpu_custom_call.1} parent=51 // pred_region
          %305 = dma.done [#allocation16], 2048
        $region60: #{tpu_custom_call.1} parent=51 // pred_fallthru
          _
        %s306 = sand.u32 %s22, 1
        %s307 = scalar_lea.sflag [#allocation13], %s306
        %s308 = sand.u32 %s177, 1
        %s309 = smul.addr %s308, 128
        %s310 = scalar_lea.vmem [#allocation17], %s309
        // Predicated region
        $region61: #{tpu_custom_call.1} parent=51 // pred_check
          %p311 = pneg %p190
        $region62: #{tpu_custom_call.1} parent=51 // pred_check_branch
          %313 = sbr.rel (%p311) target = $region64
        $region63: #{tpu_custom_call.1} parent=51 // pred_region
          %314 = dma.done %s307, 2048
        $region64: #{tpu_custom_call.1} parent=51 // pred_fallthru
          _
        %p315 = pneg %p38
        %p316 = pneg %p35
        %p317 = pneg %p59
        %p318 = pneg %p56
        %p319 = pneg %p80
        %p320 = pneg %p77
        %p321 = pneg %p101
        %p322 = pneg %p98
        %p323 = pneg %p122
        %p324 = pneg %p119
        %p325 = pneg %p143
        %p326 = pneg %p140
        %p327 = pneg %p164
        %p328 = pneg %p161
        %s329 = sand.u32 %s22, 1
        %s330 = scalar_lea.sflag [#allocation13], %s329
        %s331 = sand.u32 %s177, 1
        %s332 = smul.addr %s331, 128
        %s333 = scalar_lea.vmem [#allocation17], %s332
        %p334 = pneg %p190
        %p335 = pneg %p187
        %p336 = pneg %p211
        %p337 = pneg %p208
        %p338 = scmp.eq.s32.totalorder %s22, 0
        // Predicated region
        $region65: #{tpu_custom_call.1} parent=51 // pred_check
          %p339 = pneg %p338
        $region66: #{tpu_custom_call.1} parent=51 // pred_check_branch
          %341 = sbr.rel (%p339) target = $region68
        $region67: #{tpu_custom_call.1} parent=51 // pred_region
          %v342 = vld [vmem:[%s0] sm:$0xff]
          %v343 = vld [vmem:[%s0 + $0x8] sm:$0xff]
          %v344 = vld [vmem:[%s0 + $0x10] sm:$0xff]
          %v345 = vld [vmem:[%s0 + $0x18] sm:$0xff]
          %v346 = vld [vmem:[%s0 + $0x20] sm:$0xff]
          %v347 = vld [vmem:[%s0 + $0x28] sm:$0xff]
          %v348 = vld [vmem:[%s0 + $0x30] sm:$0xff]
          %v349 = vld [vmem:[%s0 + $0x38] sm:$0xff]
          %v350 = vld [vmem:[%s0 + $0x40] sm:$0xff]
          %v351 = vld [vmem:[%s0 + $0x48] sm:$0xff]
          %v352 = vld [vmem:[%s0 + $0x50] sm:$0xff]
          %v353 = vld [vmem:[%s0 + $0x58] sm:$0xff]
          %v354 = vlaneseq
          %v355 = vand.u32 %v354, 127
          %356 = vset.pattern.permute.xlu0 0
          %357 = vperm.xlu0 %356, %v342
          %v358 = vpop.permute.xlu0 %357
          %359 = vset.pattern.permute.xlu0 0
          %360 = vperm.xlu0 %359, %v343
          %v361 = vpop.permute.xlu0 %360
          %362 = vset.pattern.permute.xlu0 0
          %363 = vperm.xlu0 %362, %v344
          %v364 = vpop.permute.xlu0 %363
          %365 = vset.pattern.permute.xlu0 0
          %366 = vperm.xlu0 %365, %v345
          %v367 = vpop.permute.xlu0 %366
          %368 = vset.pattern.permute.xlu0 0
          %369 = vperm.xlu0 %368, %v346
          %v370 = vpop.permute.xlu0 %369
          %371 = vset.pattern.permute.xlu0 0
          %372 = vperm.xlu0 %371, %v347
          %v373 = vpop.permute.xlu0 %372
          %374 = vset.pattern.permute.xlu0 0
          %375 = vperm.xlu0 %374, %v348
          %v376 = vpop.permute.xlu0 %375
          %377 = vset.pattern.permute.xlu0 0
          %378 = vperm.xlu0 %377, %v349
          %v379 = vpop.permute.xlu0 %378
          %380 = vset.pattern.permute.xlu0 0
          %381 = vperm.xlu0 %380, %v350
          %v382 = vpop.permute.xlu0 %381
          %383 = vset.pattern.permute.xlu0 0
          %384 = vperm.xlu0 %383, %v351
          %v385 = vpop.permute.xlu0 %384
          %386 = vset.pattern.permute.xlu0 0
          %387 = vperm.xlu0 %386, %v352
          %v388 = vpop.permute.xlu0 %387
          %389 = vset.pattern.permute.xlu0 0
          %390 = vperm.xlu0 %389, %v353
          %v391 = vpop.permute.xlu0 %390
          %vm392 = vcmp.eq.s32.totalorder %v355, %v358
          %vm393 = vcmp.eq.s32.totalorder %v355, %v361
          %vm394 = vcmp.eq.s32.totalorder %v355, %v364
          %vm395 = vcmp.eq.s32.totalorder %v355, %v367
          %vm396 = vcmp.eq.s32.totalorder %v355, %v370
          %vm397 = vcmp.eq.s32.totalorder %v355, %v373
          %vm398 = vcmp.eq.s32.totalorder %v355, %v376
          %vm399 = vcmp.eq.s32.totalorder %v355, %v379
          %vm400 = vcmp.eq.s32.totalorder %v355, %v382
          %vm401 = vcmp.eq.s32.totalorder %v355, %v385
          %vm402 = vcmp.eq.s32.totalorder %v355, %v388
          %vm403 = vcmp.eq.s32.totalorder %v355, %v391
          %v404 = vsel %vm392, 1, 0
          %v405 = vsel %vm393, 1, 0
          %v406 = vsel %vm394, 1, 0
          %v407 = vsel %vm395, 1, 0
          %v408 = vsel %vm396, 1, 0
          %v409 = vsel %vm397, 1, 0
          %v410 = vsel %vm398, 1, 0
          %v411 = vsel %vm399, 1, 0
          %v412 = vsel %vm400, 1, 0
          %v413 = vsel %vm401, 1, 0
          %v414 = vsel %vm402, 1, 0
          %v415 = vsel %vm403, 1, 0
          %v416 = vcvt.s32.f32 %v404
          %v417 = vcvt.s32.f32 %v405
          %v418 = vcvt.s32.f32 %v406
          %v419 = vcvt.s32.f32 %v407
          %v420 = vcvt.s32.f32 %v408
          %v421 = vcvt.s32.f32 %v409
          %v422 = vcvt.s32.f32 %v410
          %v423 = vcvt.s32.f32 %v411
          %v424 = vcvt.s32.f32 %v412
          %v425 = vcvt.s32.f32 %v413
          %v426 = vcvt.s32.f32 %v414
          %v427 = vcvt.s32.f32 %v415
          %v428 = vld [vmem:[%s2] sm:$0xff]
          %v429 = vld [vmem:[%s2 + $0x8] sm:$0xff]
          %v430 = vld [vmem:[%s2 + $0x10] sm:$0xff]
          %v431 = vld [vmem:[%s2 + $0x18] sm:$0xff]
          %v432 = vld [vmem:[%s2 + $0x20] sm:$0xff]
          %v433 = vld [vmem:[%s2 + $0x28] sm:$0xff]
          %v434 = vld [vmem:[%s2 + $0x30] sm:$0xff]
          %v435 = vld [vmem:[%s2 + $0x38] sm:$0xff]
          %vm436 = vcmask 523264
          %v438 = vsel %vm436, %v416, 0
          %v441 = vsel %vm436, %v417, 0
          %v444 = vsel %vm436, %v418, 0
          %v447 = vsel %vm436, %v419, 0
          %v450 = vsel %vm436, %v420, 0
          %v453 = vsel %vm436, %v421, 0
          %v456 = vsel %vm436, %v422, 0
          %v459 = vsel %vm436, %v423, 0
          %v462 = vsel %vm436, %v424, 0
          %v465 = vsel %vm436, %v425, 0
          %v468 = vsel %vm436, %v426, 0
          %v471 = vsel %vm436, %v427, 0
          %473 = vmatprep.subr.mxu0 0.0
          %474 = vmatpush1.msra.mxu0 0.0
          %475 = vmatprep.subr.mxu0 0.0
          %476 = vmatpush1.msra.mxu0 0.0
          %477 = vmatprep.subr.mxu0 0.0
          %478 = vmatpush1.msra.mxu0 0.0
          %479 = vmatprep.subr.mxu0 0.0
          %480 = vmatpush1.msra.mxu0 0.0
          %481 = vmatprep.subr.mxu0 0.0
          %482 = vmatpush1.msra.mxu0 0.0
          %483 = vmatprep.subr.mxu0 0.0
          %484 = vmatpush1.msra.mxu0 0.0
          %485 = vmatprep.subr.mxu0 0.0
          %486 = vmatpush1.msra.mxu0 0.0
          %487 = vmatprep.subr.mxu0 0.0
          %488 = vmatpush1.msra.mxu0 0.0
          %489 = vmatprep.subr.mxu0 0.0
          %490 = vmatpush1.msra.mxu0 %v435
          %491 = vmatprep.subr.mxu0 0.0
          %492 = vmatpush1.msra.mxu0 %v434
          %493 = vmatprep.subr.mxu0 0.0
          %494 = vmatpush1.msra.mxu0 %v433
          %495 = vmatprep.subr.mxu0 0.0
          %496 = vmatpush1.msra.mxu0 %v432
          %497 = vmatprep.subr.mxu0 0.0
          %498 = vmatpush1.msra.mxu0 %v431
          %499 = vmatprep.subr.mxu0 0.0
          %500 = vmatpush1.msra.mxu0 %v430
          %501 = vmatprep.subr.mxu0 0.0
          %502 = vmatpush1.msra.mxu0 %v429
          %503 = vmatprep.subr.mxu0 0.0
          %504 = vmatpush1.msra.mxu0 %v428
          %505 = vmatprep.subr.mxu0 0.0
          %506 = vmatpush2.msra.mxu0 0.0
          %507 = vmatprep.subr.mxu0 0.0
          %508 = vmatpush2.msra.mxu0 0.0
          %509 = vmatprep.subr.mxu0 0.0
          %510 = vmatpush2.msra.mxu0 0.0
          %511 = vmatprep.subr.mxu0 0.0
          %512 = vmatpush2.msra.mxu0 0.0
          %513 = vmatprep.subr.mxu0 0.0
          %514 = vmatpush2.msra.mxu0 0.0
          %515 = vmatprep.subr.mxu0 0.0
          %516 = vmatpush2.msra.mxu0 0.0
          %517 = vmatprep.subr.mxu0 0.0
          %518 = vmatpush2.msra.mxu0 0.0
          %519 = vmatprep.subr.mxu0 0.0
          %520 = vmatpush2.msra.mxu0 0.0
          %521 = vmatprep.subr.mxu0 0.0
          %522 = vmatpush2.msra.mxu0 0.0
          %523 = vmatprep.subr.mxu0 0.0
          %524 = vmatpush2.msra.mxu0 0.0
          %525 = vmatprep.subr.mxu0 0.0
          %526 = vmatpush2.msra.mxu0 0.0
          %527 = vmatprep.subr.mxu0 0.0
          %528 = vmatpush2.msra.mxu0 0.0
          %529 = vmatprep.subr.mxu0 0.0
          %530 = vmatpush2.msra.mxu0 0.0
          %531 = vmatprep.subr.mxu0 0.0
          %532 = vmatpush2.msra.mxu0 0.0
          %533 = vmatprep.subr.mxu0 0.0
          %534 = vmatpush2.msra.mxu0 0.0
          %535 = vmatprep.subr.mxu0 0.0
          %536 = vmatpush2.msra.mxu0 0.0
          %537 = vmatprep.mubr.f32.mxu0 0.0
          %538 = vmatmul.mubr.f32.gmra.mxu0 %v438
          %v539 = vpop.f32.mrf.mxu0
          %v540 = vadd.f32 0.0, %v539
          %v541 = vpop.f32.mrf.mxu0
          %542 = vmatprep.mubr.f32.mxu0 0.0
          %543 = vmatmul.mubr.f32.gmra.mxu0 %v441
          %v544 = vpop.f32.mrf.mxu0
          %v545 = vadd.f32 0.0, %v544
          %v546 = vpop.f32.mrf.mxu0
          %547 = vmatprep.mubr.f32.mxu0 0.0
          %548 = vmatmul.mubr.f32.gmra.mxu0 %v444
          %v549 = vpop.f32.mrf.mxu0
          %v550 = vadd.f32 0.0, %v549
          %v551 = vpop.f32.mrf.mxu0
          %552 = vmatprep.mubr.f32.mxu0 0.0
          %553 = vmatmul.mubr.f32.gmra.mxu0 %v447
          %v554 = vpop.f32.mrf.mxu0
          %v555 = vadd.f32 0.0, %v554
          %v556 = vpop.f32.mrf.mxu0
          %557 = vmatprep.mubr.f32.mxu0 0.0
          %558 = vmatmul.mubr.f32.gmra.mxu0 %v450
          %v559 = vpop.f32.mrf.mxu0
          %v560 = vadd.f32 0.0, %v559
          %v561 = vpop.f32.mrf.mxu0
          %562 = vmatprep.mubr.f32.mxu0 0.0
          %563 = vmatmul.mubr.f32.gmra.mxu0 %v453
          %v564 = vpop.f32.mrf.mxu0
          %v565 = vadd.f32 0.0, %v564
          %v566 = vpop.f32.mrf.mxu0
          %567 = vmatprep.mubr.f32.mxu0 0.0
          %568 = vmatmul.mubr.f32.gmra.mxu0 %v456
          %v569 = vpop.f32.mrf.mxu0
          %v570 = vadd.f32 0.0, %v569
          %v571 = vpop.f32.mrf.mxu0
          %572 = vmatprep.mubr.f32.mxu0 0.0
          %573 = vmatmul.mubr.f32.gmra.mxu0 %v459
          %v574 = vpop.f32.mrf.mxu0
          %v575 = vadd.f32 0.0, %v574
          %v576 = vpop.f32.mrf.mxu0
          %577 = vmatprep.mubr.f32.mxu0 0.0
          %578 = vmatmul.mubr.f32.gmra.mxu0 %v462
          %v579 = vpop.f32.mrf.mxu0
          %v580 = vadd.f32 0.0, %v579
          %v581 = vpop.f32.mrf.mxu0
          %582 = vmatprep.mubr.f32.mxu0 0.0
          %583 = vmatmul.mubr.f32.gmra.mxu0 %v465
          %v584 = vpop.f32.mrf.mxu0
          %v585 = vadd.f32 0.0, %v584
          %v586 = vpop.f32.mrf.mxu0
          %587 = vmatprep.mubr.f32.mxu0 0.0
          %588 = vmatmul.mubr.f32.gmra.mxu0 %v468
          %v589 = vpop.f32.mrf.mxu0
          %v590 = vadd.f32 0.0, %v589
          %v591 = vpop.f32.mrf.mxu0
          %592 = vmatprep.mubr.f32.mxu0 0.0
          %593 = vmatmul.mubr.f32.gmra.mxu0 %v471
          %v594 = vpop.f32.mrf.mxu0
          %v595 = vadd.f32 0.0, %v594
          %v596 = vpop.f32.mrf.mxu0
          %597 = vdwg.mxu0
          %v598 = vlaneseq
          %v599 = vshrl.u32 %v598, 7
          %v600 = vadd.s32 %v599, 8
          %v601 = vmul.u32 %v599, 8
          %v602 = vmul.u32 %v600, 8
          %vm603 = vcmp.ge.s32.totalorder %v355, %v601
          %vm604 = vcmp.ge.s32.totalorder %v355, %v602
          %v605 = vadd.s32 %v601, 8
          %v606 = vadd.s32 %v602, 8
          %vm607 = vcmp.lt.s32.totalorder %v355, %v605
          %vm608 = vcmp.lt.s32.totalorder %v355, %v606
          %vm609 = vmand %vm603, %vm607
          %vm610 = vmand %vm604, %vm608
          %v611 = vsel %vm609, 1, 0
          %v612 = vsel %vm610, 1, 0
          %v613 = vcvt.s32.f32 %v611
          %v614 = vcvt.s32.f32 %v612
          %v615 = vld [vmem:[%s1] sm:$0x1]
          %v617 = vlaneseq
          %v618 = vshrl.u32 %v617, 7
          %v619 = vsub.s32 0, %v618
          %v620 = vrot.slane %v615, %v619
          %v622 = vmul.f32 %v613, %v620
          %v623 = vmul.f32 %v614, %v620
          %vm624 = vcmask 785408
          %v626 = vsel %vm624, %v622, 0
          %v629 = vsel %vm624, %v623, 0
          %631 = vmatprep.subr.mxu0 0.0
          %632 = vmatpush1.msra.mxu0 0.0
          %633 = vmatprep.subr.mxu0 0.0
          %634 = vmatpush1.msra.mxu0 0.0
          %635 = vmatprep.subr.mxu0 0.0
          %636 = vmatpush1.msra.mxu0 0.0
          %637 = vmatprep.subr.mxu0 0.0
          %638 = vmatpush1.msra.mxu0 0.0
          %639 = vmatprep.subr.mxu0 0.0
          %640 = vmatpush1.msra.mxu0 %v595
          %641 = vmatprep.subr.mxu0 0.0
          %642 = vmatpush1.msra.mxu0 %v590
          %643 = vmatprep.subr.mxu0 0.0
          %644 = vmatpush1.msra.mxu0 %v585
          %645 = vmatprep.subr.mxu0 0.0
          %646 = vmatpush1.msra.mxu0 %v580
          %647 = vmatprep.subr.mxu0 0.0
          %648 = vmatpush1.msra.mxu0 %v575
          %649 = vmatprep.subr.mxu0 0.0
          %650 = vmatpush1.msra.mxu0 %v570
          %651 = vmatprep.subr.mxu0 0.0
          %652 = vmatpush1.msra.mxu0 %v565
          %653 = vmatprep.subr.mxu0 0.0
          %654 = vmatpush1.msra.mxu0 %v560
          %655 = vmatprep.subr.mxu0 0.0
          %656 = vmatpush1.msra.mxu0 %v555
          %657 = vmatprep.subr.mxu0 0.0
          %658 = vmatpush1.msra.mxu0 %v550
          %659 = vmatprep.subr.mxu0 0.0
          %660 = vmatpush1.msra.mxu0 %v545
          %661 = vmatprep.subr.mxu0 0.0
          %662 = vmatpush1.msra.mxu0 %v540
          %663 = vmatprep.subr.mxu0 0.0
          %664 = vmatpush2.msra.mxu0 0.0
          %665 = vmatprep.subr.mxu0 0.0
          %666 = vmatpush2.msra.mxu0 0.0
          %667 = vmatprep.subr.mxu0 0.0
          %668 = vmatpush2.msra.mxu0 0.0
          %669 = vmatprep.subr.mxu0 0.0
          %670 = vmatpush2.msra.mxu0 0.0
          %671 = vmatprep.subr.mxu0 0.0
          %672 = vmatpush2.msra.mxu0 0.0
          %673 = vmatprep.subr.mxu0 0.0
          %674 = vmatpush2.msra.mxu0 0.0
          %675 = vmatprep.subr.mxu0 0.0
          %676 = vmatpush2.msra.mxu0 0.0
          %677 = vmatprep.subr.mxu0 0.0
          %678 = vmatpush2.msra.mxu0 0.0
          %679 = vmatprep.subr.mxu0 0.0
          %680 = vmatpush2.msra.mxu0 0.0
          %681 = vmatprep.subr.mxu0 0.0
          %682 = vmatpush2.msra.mxu0 0.0
          %683 = vmatprep.subr.mxu0 0.0
          %684 = vmatpush2.msra.mxu0 0.0
          %685 = vmatprep.subr.mxu0 0.0
          %686 = vmatpush2.msra.mxu0 0.0
          %687 = vmatprep.subr.mxu0 0.0
          %688 = vmatpush2.msra.mxu0 0.0
          %689 = vmatprep.subr.mxu0 0.0
          %690 = vmatpush2.msra.mxu0 0.0
          %691 = vmatprep.subr.mxu0 0.0
          %692 = vmatpush2.msra.mxu0 0.0
          %693 = vmatprep.subr.mxu0 0.0
          %694 = vmatpush2.msra.mxu0 0.0
          %695 = vmatprep.mubr.f32.mxu0 0.0
          %696 = vmatmul.mubr.f32.gmra.mxu0 %v626
          %v697 = vpop.f32.mrf.mxu0
          %v698 = vadd.f32 0.0, %v697
          %v699 = vpop.f32.mrf.mxu0
          %700 = vmatprep.mubr.f32.mxu0 0.0
          %701 = vmatmul.mubr.f32.gmra.mxu0 %v629
          %v702 = vpop.f32.mrf.mxu0
          %v703 = vadd.f32 0.0, %v702
          %v704 = vpop.f32.mrf.mxu0
          %705 = vdwg.mxu0
          %v706 = vld [vmem:[#allocation12] sm:$0xff]
          %v707 = vld [vmem:[#allocation12 + $0x8] sm:$0xff]
          %v708 = vld [vmem:[#allocation12 + $0x10] sm:$0xff]
          %v709 = vld [vmem:[#allocation12 + $0x18] sm:$0xff]
          %v710 = vld [vmem:[#allocation12 + $0x20] sm:$0xff]
          %v711 = vld [vmem:[#allocation12 + $0x28] sm:$0xff]
          %v712 = vld [vmem:[#allocation12 + $0x30] sm:$0xff]
          %v713 = vld [vmem:[#allocation12 + $0x38] sm:$0xff]
          %v714 = vld [vmem:[#allocation12 + $0x40] sm:$0xff]
          %v715 = vld [vmem:[#allocation12 + $0x48] sm:$0xff]
          %v716 = vld [vmem:[#allocation12 + $0x50] sm:$0xff]
          %v717 = vld [vmem:[#allocation12 + $0x58] sm:$0xff]
          %v718 = vld [vmem:[#allocation12 + $0x60] sm:$0xff]
          %v719 = vld [vmem:[#allocation12 + $0x68] sm:$0xff]
          %v720 = vld [vmem:[#allocation12 + $0x70] sm:$0xff]
          %v721 = vld [vmem:[#allocation12 + $0x78] sm:$0xff]
          %v722 = vld [vmem:[%s4] sm:$0x1]
          %v724 = vlaneseq
          %v725 = vshrl.u32 %v724, 7
          %v726 = vsub.s32 0, %v725
          %v727 = vrot.slane %v722, %v726
          %729 = vmatprep.subr.mxu0 0.0
          %730 = vmatpush1.msra.mxu0 %v721
          %731 = vmatprep.subr.mxu0 0.0
          %732 = vmatpush1.msra.mxu0 %v720
          %733 = vmatprep.subr.mxu0 0.0
          %734 = vmatpush1.msra.mxu0 %v719
          %735 = vmatprep.subr.mxu0 0.0
          %736 = vmatpush1.msra.mxu0 %v718
          %737 = vmatprep.subr.mxu0 0.0
          %738 = vmatpush1.msra.mxu0 %v717
          %739 = vmatprep.subr.mxu0 0.0
          %740 = vmatpush1.msra.mxu0 %v716
          %741 = vmatprep.subr.mxu0 0.0
          %742 = vmatpush1.msra.mxu0 %v715
          %743 = vmatprep.subr.mxu0 0.0
          %744 = vmatpush1.msra.mxu0 %v714
          %745 = vmatprep.subr.mxu0 0.0
          %746 = vmatpush1.msra.mxu0 %v713
          %747 = vmatprep.subr.mxu0 0.0
          %748 = vmatpush1.msra.mxu0 %v712
          %749 = vmatprep.subr.mxu0 0.0
          %750 = vmatpush1.msra.mxu0 %v711
          %751 = vmatprep.subr.mxu0 0.0
          %752 = vmatpush1.msra.mxu0 %v710
          %753 = vmatprep.subr.mxu0 0.0
          %754 = vmatpush1.msra.mxu0 %v709
          %755 = vmatprep.subr.mxu0 0.0
          %756 = vmatpush1.msra.mxu0 %v708
          %757 = vmatprep.subr.mxu0 0.0
          %758 = vmatpush1.msra.mxu0 %v707
          %759 = vmatprep.subr.mxu0 0.0
          %760 = vmatpush1.msra.mxu0 %v706
          %761 = vmatprep.subr.mxu0 0.0
          %762 = vmatpush2.msra.mxu0 0.0
          %763 = vmatprep.subr.mxu0 0.0
          %764 = vmatpush2.msra.mxu0 0.0
          %765 = vmatprep.subr.mxu0 0.0
          %766 = vmatpush2.msra.mxu0 0.0
          %767 = vmatprep.subr.mxu0 0.0
          %768 = vmatpush2.msra.mxu0 0.0
          %769 = vmatprep.subr.mxu0 0.0
          %770 = vmatpush2.msra.mxu0 0.0
          %771 = vmatprep.subr.mxu0 0.0
          %772 = vmatpush2.msra.mxu0 0.0
          %773 = vmatprep.subr.mxu0 0.0
          %774 = vmatpush2.msra.mxu0 0.0
          %775 = vmatprep.subr.mxu0 0.0
          %776 = vmatpush2.msra.mxu0 0.0
          %777 = vmatprep.subr.mxu0 0.0
          %778 = vmatpush2.msra.mxu0 0.0
          %779 = vmatprep.subr.mxu0 0.0
          %780 = vmatpush2.msra.mxu0 0.0
          %781 = vmatprep.subr.mxu0 0.0
          %782 = vmatpush2.msra.mxu0 0.0
          %783 = vmatprep.subr.mxu0 0.0
          %784 = vmatpush2.msra.mxu0 0.0
          %785 = vmatprep.subr.mxu0 0.0
          %786 = vmatpush2.msra.mxu0 0.0
          %787 = vmatprep.subr.mxu0 0.0
          %788 = vmatpush2.msra.mxu0 0.0
          %789 = vmatprep.subr.mxu0 0.0
          %790 = vmatpush2.msra.mxu0 0.0
          %791 = vmatprep.subr.mxu0 0.0
          %792 = vmatpush2.msra.mxu0 0.0
          %793 = vmatprep.mubr.f32.mxu0 0.0
          %794 = vmatmul.mubr.f32.gmra.mxu0 %v698
          %v795 = vpop.f32.mrf.mxu0
          %v796 = vadd.f32 %v727, %v795
          %v797 = vpop.f32.mrf.mxu0
          %798 = vdwg.mxu0
          %v799 = vld [vmem:[#allocation15] sm:$0xff]
          %v800 = vld [vmem:[#allocation15 + $0x8] sm:$0xff]
          %v801 = vld [vmem:[#allocation15 + $0x10] sm:$0xff]
          %v802 = vld [vmem:[#allocation15 + $0x18] sm:$0xff]
          %v803 = vld [vmem:[#allocation15 + $0x20] sm:$0xff]
          %v804 = vld [vmem:[#allocation15 + $0x28] sm:$0xff]
          %v805 = vld [vmem:[#allocation15 + $0x30] sm:$0xff]
          %v806 = vld [vmem:[#allocation15 + $0x38] sm:$0xff]
          %v807 = vld [vmem:[#allocation15 + $0x40] sm:$0xff]
          %v808 = vld [vmem:[#allocation15 + $0x48] sm:$0xff]
          %v809 = vld [vmem:[#allocation15 + $0x50] sm:$0xff]
          %v810 = vld [vmem:[#allocation15 + $0x58] sm:$0xff]
          %v811 = vld [vmem:[#allocation15 + $0x60] sm:$0xff]
          %v812 = vld [vmem:[#allocation15 + $0x68] sm:$0xff]
          %v813 = vld [vmem:[#allocation15 + $0x70] sm:$0xff]
          %v814 = vld [vmem:[#allocation15 + $0x78] sm:$0xff]
          %v815 = vld [vmem:[%s6] sm:$0x1]
          %v817 = vlaneseq
          %v818 = vshrl.u32 %v817, 7
          %v819 = vsub.s32 0, %v818
          %v820 = vrot.slane %v815, %v819
          %822 = vmatprep.subr.mxu0 0.0
          %823 = vmatpush1.msra.mxu0 %v814
          %824 = vmatprep.subr.mxu0 0.0
          %825 = vmatpush1.msra.mxu0 %v813
          %826 = vmatprep.subr.mxu0 0.0
          %827 = vmatpush1.msra.mxu0 %v812
          %828 = vmatprep.subr.mxu0 0.0
          %829 = vmatpush1.msra.mxu0 %v811
          %830 = vmatprep.subr.mxu0 0.0
          %831 = vmatpush1.msra.mxu0 %v810
          %832 = vmatprep.subr.mxu0 0.0
          %833 = vmatpush1.msra.mxu0 %v809
          %834 = vmatprep.subr.mxu0 0.0
          %835 = vmatpush1.msra.mxu0 %v808
          %836 = vmatprep.subr.mxu0 0.0
          %837 = vmatpush1.msra.mxu0 %v807
          %838 = vmatprep.subr.mxu0 0.0
          %839 = vmatpush1.msra.mxu0 %v806
          %840 = vmatprep.subr.mxu0 0.0
          %841 = vmatpush1.msra.mxu0 %v805
          %842 = vmatprep.subr.mxu0 0.0
          %843 = vmatpush1.msra.mxu0 %v804
          %844 = vmatprep.subr.mxu0 0.0
          %845 = vmatpush1.msra.mxu0 %v803
          %846 = vmatprep.subr.mxu0 0.0
          %847 = vmatpush1.msra.mxu0 %v802
          %848 = vmatprep.subr.mxu0 0.0
          %849 = vmatpush1.msra.mxu0 %v801
          %850 = vmatprep.subr.mxu0 0.0
          %851 = vmatpush1.msra.mxu0 %v800
          %852 = vmatprep.subr.mxu0 0.0
          %853 = vmatpush1.msra.mxu0 %v799
          %854 = vmatprep.subr.mxu0 0.0
          %855 = vmatpush2.msra.mxu0 0.0
          %856 = vmatprep.subr.mxu0 0.0
          %857 = vmatpush2.msra.mxu0 0.0
          %858 = vmatprep.subr.mxu0 0.0
          %859 = vmatpush2.msra.mxu0 0.0
          %860 = vmatprep.subr.mxu0 0.0
          %861 = vmatpush2.msra.mxu0 0.0
          %862 = vmatprep.subr.mxu0 0.0
          %863 = vmatpush2.msra.mxu0 0.0
          %864 = vmatprep.subr.mxu0 0.0
          %865 = vmatpush2.msra.mxu0 0.0
          %866 = vmatprep.subr.mxu0 0.0
          %867 = vmatpush2.msra.mxu0 0.0
          %868 = vmatprep.subr.mxu0 0.0
          %869 = vmatpush2.msra.mxu0 0.0
          %870 = vmatprep.subr.mxu0 0.0
          %871 = vmatpush2.msra.mxu0 0.0
          %872 = vmatprep.subr.mxu0 0.0
          %873 = vmatpush2.msra.mxu0 0.0
          %874 = vmatprep.subr.mxu0 0.0
          %875 = vmatpush2.msra.mxu0 0.0
          %876 = vmatprep.subr.mxu0 0.0
          %877 = vmatpush2.msra.mxu0 0.0
          %878 = vmatprep.subr.mxu0 0.0
          %879 = vmatpush2.msra.mxu0 0.0
          %880 = vmatprep.subr.mxu0 0.0
          %881 = vmatpush2.msra.mxu0 0.0
          %882 = vmatprep.subr.mxu0 0.0
          %883 = vmatpush2.msra.mxu0 0.0
          %884 = vmatprep.subr.mxu0 0.0
          %885 = vmatpush2.msra.mxu0 0.0
          %886 = vmatprep.mubr.f32.mxu0 0.0
          %887 = vmatmul.mubr.f32.gmra.mxu0 %v703
          %v888 = vpop.f32.mrf.mxu0
          %v889 = vadd.f32 %v820, %v888
          %v890 = vpop.f32.mrf.mxu0
          %891 = vdwg.mxu0
          %v892 = vmul.f32 %v796, %v796
          %vm893 = vcmask 1043456
          %v894 = vsel %vm893, %v892, 0.0
          %895 = vadd.xlane.f32.xlu0 %v894
          %v896 = vpop.xlane.xlu0 %895
          %v897 = vmax.f32 %v896, 1e-24
          %v898 = vrsqrt.pop %v897
          %v899 = vmul.f32 %v796, %v898
          %vm900 = vcmask 1047556
          %v901 = vsel %vm900, %v892, 0.0
          %902 = vadd.xlane.f32.xlu0 %v901
          %v903 = vpop.xlane.xlu0 %902
          %v904 = vmax.f32 %v903, 1e-24
          %v905 = vrsqrt.pop %v904
          %v906 = vmul.f32 %v796, %v905
          %v907 = vmul.f32 %v889, %v889
          %v908 = vsel %vm893, %v907, 0.0
          %909 = vadd.xlane.f32.xlu0 %v908
          %v910 = vpop.xlane.xlu0 %909
          %v911 = vmax.f32 %v910, 1e-24
          %v912 = vrsqrt.pop %v911
          %v913 = vmul.f32 %v889, %v912
          %914 = vst [vmem:[#allocation2] sm:$0xf] %v899
          %915 = vst [vmem:[#allocation2] sm:$0xf0] %v906
          %v916 = vmul.f32 %v899, 0.8
          %v917 = vmul.f32 %v906, 0.2
          %v919 = vrot.slane %v917, 4
          %v921 = vadd.f32 %v916, %v919
          %922 = vst [vmem:[#allocation2 + $0x8] sm:$0xf] %v921
          %v924 = vrot.slane %v899, 4
          %v926 = vsub.f32 %v906, %v924
          %927 = vst [vmem:[#allocation2 + $0x8] sm:$0xf0] %v926
          %928 = vst [vmem:[#allocation3] sm:$0xf] %v913
          %vm929 = vcmask 3072
          %930 = vst.msk [vmem:[#allocation4] sm:$0xf] %vm929, -inf
          %931 = vst.msk [vmem:[#allocation7] sm:$0xf] %vm929, -inf
          %932 = vst.msk [vmem:[#allocation10] sm:$0xf] %vm929, -inf
          %933 = vst.msk [vmem:[#allocation5] sm:$0xf] %vm929, 0.0
          %934 = vst.msk [vmem:[#allocation8] sm:$0xf] %vm929, 0.0
          %935 = vst.msk [vmem:[#allocation6] sm:$0xf] %vm929, 0.0
          %936 = vst.msk [vmem:[#allocation9] sm:$0xf] %vm929, 0.0
          %937 = vst.msk [vmem:[#allocation11] sm:$0xf] %vm929, 0.0
        $region68: #{tpu_custom_call.1} parent=51 // pred_fallthru
          _
        %v938 = vld [vmem:[%s310] sm:$0xff]
        %v939 = vld [vmem:[%s310 + $0x8] sm:$0xff]
        %v940 = vld [vmem:[%s310 + $0x10] sm:$0xff]
        %v941 = vld [vmem:[%s310 + $0x18] sm:$0xff]
        %v942 = vld [vmem:[%s310 + $0x20] sm:$0xff]
        %v943 = vld [vmem:[%s310 + $0x28] sm:$0xff]
        %v944 = vld [vmem:[%s310 + $0x30] sm:$0xff]
        %v945 = vld [vmem:[%s310 + $0x38] sm:$0xff]
        %v946 = vld [vmem:[%s310 + $0x40] sm:$0xff]
        %v947 = vld [vmem:[%s310 + $0x48] sm:$0xff]
        %v948 = vld [vmem:[%s310 + $0x50] sm:$0xff]
        %v949 = vld [vmem:[%s310 + $0x58] sm:$0xff]
        %v950 = vld [vmem:[%s310 + $0x60] sm:$0xff]
        %v951 = vld [vmem:[%s310 + $0x68] sm:$0xff]
        %v952 = vld [vmem:[%s310 + $0x70] sm:$0xff]
        %v953 = vld [vmem:[%s310 + $0x78] sm:$0xff]
        %v954 = vld [vmem:[#allocation2] sm:$0xff]
        %v955 = vld [vmem:[#allocation2 + $0x8] sm:$0xff]
        %956 = vmatprep.subr.mxu0 0.0
        %957 = vmatpush1.msra.mxu0 %v953
        %958 = vmatprep.subr.mxu0 0.0
        %959 = vmatpush1.msra.mxu0 %v952
        %960 = vmatprep.subr.mxu0 0.0
        %961 = vmatpush1.msra.mxu0 %v951
        %962 = vmatprep.subr.mxu0 0.0
        %963 = vmatpush1.msra.mxu0 %v950
        %964 = vmatprep.subr.mxu0 0.0
        %965 = vmatpush1.msra.mxu0 %v949
        %966 = vmatprep.subr.mxu0 0.0
        %967 = vmatpush1.msra.mxu0 %v948
        %968 = vmatprep.subr.mxu0 0.0
        %969 = vmatpush1.msra.mxu0 %v947
        %970 = vmatprep.subr.mxu0 0.0
        %971 = vmatpush1.msra.mxu0 %v946
        %972 = vmatprep.subr.mxu0 0.0
        %973 = vmatpush1.msra.mxu0 %v945
        %974 = vmatprep.subr.mxu0 0.0
        %975 = vmatpush1.msra.mxu0 %v944
        %976 = vmatprep.subr.mxu0 0.0
        %977 = vmatpush1.msra.mxu0 %v943
        %978 = vmatprep.subr.mxu0 0.0
        %979 = vmatpush1.msra.mxu0 %v942
        %980 = vmatprep.subr.mxu0 0.0
        %981 = vmatpush1.msra.mxu0 %v941
        %982 = vmatprep.subr.mxu0 0.0
        %983 = vmatpush1.msra.mxu0 %v940
        %984 = vmatprep.subr.mxu0 0.0
        %985 = vmatpush1.msra.mxu0 %v939
        %986 = vmatprep.subr.mxu0 0.0
        %987 = vmatpush1.msra.mxu0 %v938
        %988 = vmatprep.subr.mxu0 0.0
        %989 = vmatpush2.msra.mxu0 0.0
        %990 = vmatprep.subr.mxu0 0.0
        %991 = vmatpush2.msra.mxu0 0.0
        %992 = vmatprep.subr.mxu0 0.0
        %993 = vmatpush2.msra.mxu0 0.0
        %994 = vmatprep.subr.mxu0 0.0
        %995 = vmatpush2.msra.mxu0 0.0
        %996 = vmatprep.subr.mxu0 0.0
        %997 = vmatpush2.msra.mxu0 0.0
        %998 = vmatprep.subr.mxu0 0.0
        %999 = vmatpush2.msra.mxu0 0.0
        %1000 = vmatprep.subr.mxu0 0.0
        %1001 = vmatpush2.msra.mxu0 0.0
        %1002 = vmatprep.subr.mxu0 0.0
        %1003 = vmatpush2.msra.mxu0 0.0
        %1004 = vmatprep.subr.mxu0 0.0
        %1005 = vmatpush2.msra.mxu0 0.0
        %1006 = vmatprep.subr.mxu0 0.0
        %1007 = vmatpush2.msra.mxu0 0.0
        %1008 = vmatprep.subr.mxu0 0.0
        %1009 = vmatpush2.msra.mxu0 0.0
        %1010 = vmatprep.subr.mxu0 0.0
        %1011 = vmatpush2.msra.mxu0 0.0
        %1012 = vmatprep.subr.mxu0 0.0
        %1013 = vmatpush2.msra.mxu0 0.0
        %1014 = vmatprep.subr.mxu0 0.0
        %1015 = vmatpush2.msra.mxu0 0.0
        %1016 = vmatprep.subr.mxu0 0.0
        %1017 = vmatpush2.msra.mxu0 0.0
        %1018 = vmatprep.subr.mxu0 0.0
        %1019 = vmatpush2.msra.mxu0 0.0
        %1020 = vmatprep.mubr.f32.mxu0 0.0
        %1021 = vmatmul.mubr.f32.gmra.mxu0 %v954
        %v1022 = vpop.f32.mrf.mxu0
        %v1023 = vadd.f32 0.0, %v1022
        %v1024 = vpop.f32.mrf.mxu0
        %1025 = vmatprep.mubr.f32.mxu0 0.0
        %1026 = vmatmul.mubr.f32.gmra.mxu0 %v955
        %v1027 = vpop.f32.mrf.mxu0
        %v1028 = vadd.f32 0.0, %v1027
        %v1029 = vpop.f32.mrf.mxu0
        %1030 = vdwg.mxu0
        %v1031 = vmul.f32 %v1023, 20.0
        %v1032 = vmul.f32 %v1028, 20.0
        %vm1033 = vcmask 1043456
        %v1034 = vsel %vm1033, %v1031, -inf
        %1035 = vmax.xlane.f32.xlu0 %v1034
        %v1036 = vpop.xlane.xlu0 %1035
        %v1037 = vld [vmem:[#allocation4] sm:$0xf]
        %v1038 = vmax.f32 %v1037, %v1036
        %v1039 = vld [vmem:[#allocation5] sm:$0xf]
        %v1040 = vsub.f32 %v1037, %v1038
        %v1041 = vmul.f32 %v1040, 1.442695
        %v1042 = vpow.pop %v1041
        %v1043 = vmul.f32 %v1039, %v1042
        %1045 = vset.pattern.permute.xlu0 0
        %1046 = vperm.xlu0 %1045, %v1038
        %v1047 = vpop.permute.xlu0 %1046
        %v1049 = vsub.f32 %v1031, %v1047
        %v1050 = vmul.f32 %v1049, 1.442695
        %v1051 = vpow.pop %v1050
        %v1052 = vsel %vm1033, %v1051, 0.0
        %1053 = vadd.xlane.f32.xlu0 %v1052
        %v1054 = vpop.xlane.xlu0 %1053
        %v1055 = vadd.f32 %v1043, %v1054
        %vm1056 = vcmask 3072
        %1057 = vst.msk [vmem:[#allocation5] sm:$0xf] %vm1056, %v1055
        %1058 = vst.msk [vmem:[#allocation4] sm:$0xf] %vm1056, %v1038
        %v1059 = vld [vmem:[#allocation6] sm:$0xf]
        %v1060 = vsel %vm1033, %v1031, 0.0
        %1061 = vadd.xlane.f32.xlu0 %v1060
        %v1062 = vpop.xlane.xlu0 %1061
        %v1063 = vadd.f32 %v1059, %v1062
        %1064 = vst.msk [vmem:[#allocation6] sm:$0xf] %vm1056, %v1063
        %vm1065 = vcmask 1047556
        %v1066 = vsel %vm1065, %v1031, -inf
        %1067 = vmax.xlane.f32.xlu0 %v1066
        %v1068 = vpop.xlane.xlu0 %1067
        %v1069 = vld [vmem:[#allocation7] sm:$0xf]
        %v1071 = vrot.slane %v1068, 4
        %v1073 = vmax.f32 %v1069, %v1071
        %v1074 = vld [vmem:[#allocation8] sm:$0xf]
        %v1075 = vsub.f32 %v1069, %v1073
        %v1076 = vmul.f32 %v1075, 1.442695
        %v1077 = vpow.pop %v1076
        %v1078 = vmul.f32 %v1074, %v1077
        %1080 = vset.pattern.permute.xlu0 0
        %1081 = vperm.xlu0 %1080, %v1073
        %v1082 = vpop.permute.xlu0 %1081
        %v1083 = vrot.slane %v1082, 4
        %v1085 = vsub.f32 %v1031, %v1083
        %v1086 = vmul.f32 %v1085, 1.442695
        %v1087 = vpow.pop %v1086
        %v1088 = vsel %vm1065, %v1087, 0.0
        %1089 = vadd.xlane.f32.xlu0 %v1088
        %v1090 = vpop.xlane.xlu0 %1089
        %v1092 = vrot.slane %v1090, 4
        %v1094 = vadd.f32 %v1078, %v1092
        %1095 = vst.msk [vmem:[#allocation8] sm:$0xf] %vm1056, %v1094
        %1096 = vst.msk [vmem:[#allocation7] sm:$0xf] %vm1056, %v1073
        %v1097 = vld [vmem:[#allocation9] sm:$0xf]
        %v1098 = vsel %vm1065, %v1031, 0.0
        %1099 = vadd.xlane.f32.xlu0 %v1098
        %v1100 = vpop.xlane.xlu0 %1099
        %v1102 = vrot.slane %v1100, 4
        %v1104 = vadd.f32 %v1097, %v1102
        %1105 = vst.msk [vmem:[#allocation9] sm:$0xf] %vm1056, %v1104
        %v1106 = vld [vmem:[#allocation10] sm:$0xf]
        %v1107 = vsel %vm1033, %v1032, -inf
        %1108 = vmax.xlane.f32.xlu0 %v1107
        %v1109 = vpop.xlane.xlu0 %1108
        %v1110 = vmax.f32 %v1106, %v1109
        %1111 = vst.msk [vmem:[#allocation10] sm:$0xf] %vm1056, %v1110
        %v1112 = vld [vmem:[#allocation11] sm:$0xf]
        %v1113 = vadd.f32 %v1032, 2.0
        %v1114 = vmax.f32 %v1113, 0.0
        %v1115 = vsel %vm1065, %v1114, 0.0
        %1116 = vadd.xlane.f32.xlu0 %v1115
        %v1117 = vpop.xlane.xlu0 %1116
        %v1119 = vrot.slane %v1117, 4
        %v1121 = vadd.f32 %v1112, %v1119
        %1122 = vst.msk [vmem:[#allocation11] sm:$0xf] %vm1056, %v1121
        %p1123 = scmp.eq.s32.totalorder %s22, 1
        // Predicated region
        $region69: #{tpu_custom_call.1} parent=51 // pred_check
          %p1124 = pneg %p1123
        $region70: #{tpu_custom_call.1} parent=51 // pred_check_branch
          %1126 = sbr.rel (%p1124) target = $region72
        $region71: #{tpu_custom_call.1} parent=51 // pred_region
          %v1127 = vld [vmem:[#allocation2] sm:$0xf]
          %v1128 = vld [vmem:[#allocation2 + $0x4] sm:$0xf]
          %v1129 = vld [vmem:[#allocation3] sm:$0xf]
          %v1130 = vmul.f32 %v1127, %v1129
          %v1131 = vsel %vm1033, %v1130, 0.0
          %1132 = vadd.xlane.f32.xlu0 %v1131
          %v1133 = vpop.xlane.xlu0 %1132
          %v1134 = vmul.f32 %v1133, 20.0
          %v1135 = vmul.f32 %v1128, %v1129
          %v1136 = vsel %vm1033, %v1135, 0.0
          %1137 = vadd.xlane.f32.xlu0 %v1136
          %v1138 = vpop.xlane.xlu0 %1137
          %v1139 = vmul.f32 %v1138, 20.0
          %v1140 = vld [vmem:[#allocation4] sm:$0xf]
          %v1141 = vld [vmem:[#allocation5] sm:$0xf]
          %v1142 = vld [vmem:[#allocation6] sm:$0xf]
          %v1143 = vmax.f32 %v1134, %v1140
          %v1144 = vsub.f32 %v1134, %v1143
          %v1145 = vmul.f32 %v1144, 1.442695
          %v1146 = vpow.pop %v1145
          %v1147 = vsub.f32 %v1140, %v1143
          %v1148 = vmul.f32 %v1147, 1.442695
          %v1149 = vpow.pop %v1148
          %v1150 = vmul.f32 %v1141, %v1149
          %v1151 = vadd.f32 %v1146, %v1150
          %v1152 = vlog2.pop %v1151
          %v1153 = vmul.f32 %v1152, 0.6931472
          %v1154 = vadd.f32 %v1143, %v1153
          %v1155 = vsub.f32 %v1134, %v1154
          %v1156 = vmul.f32 %v1154, 256.0
          %v1157 = vsub.f32 %v1142, %v1156
          %v1158 = vadd.f32 %v1155, %v1157
          %v1159 = vsub.f32 0.0, %v1155
          %v1160 = vmul.f32 %v1159, 0.9
          %v1161 = vsub.f32 0.0, %v1158
          %v1162 = vrcp.pop 257.0
          %v1163 = vmul.f32 %v1161, %v1162
          %v1164 = vmul.f32 %v1163, 0.1
          %v1165 = vadd.f32 %v1160, %v1164
          %vm1166 = vcmp.ge.f32.partialorder %v1134, %v1140
          %v1167 = vsel %vm1166, 1, 0
          %v1168 = vcvt.s32.f32 %v1167
          %v1169 = vsel %vm1056, %v1165, 0.0
          %1170 = vadd.xlane.f32.xlu0 %v1169
          %v1171 = vpop.xlane.xlu0 %1170
          %v1172 = vrot.slane %v1171, 4
          %v1173 = vadd.f32 %v1171, %v1172
          %v1174 = vrot.slane %v1173, 2
          %v1175 = vadd.f32 %v1173, %v1174
          %v1176 = vrot.slane %v1175, 1
          %v1177 = vadd.f32 %v1175, %v1176
          %s1178 = vtos %v1177
          %v1179 = vrcp.pop 4.0
          %s1180 = vtos %v1179
          %s1181 = smul.f32 %s1178, %s1180
          %v1182 = vld [vmem:[#allocation7] sm:$0xf]
          %v1183 = vld [vmem:[#allocation8] sm:$0xf]
          %v1184 = vld [vmem:[#allocation9] sm:$0xf]
          %v1185 = vmax.f32 %v1139, %v1182
          %v1186 = vsub.f32 %v1139, %v1185
          %v1187 = vmul.f32 %v1186, 1.442695
          %v1188 = vpow.pop %v1187
          %v1189 = vsub.f32 %v1182, %v1185
          %v1190 = vmul.f32 %v1189, 1.442695
          %v1191 = vpow.pop %v1190
          %v1192 = vmul.f32 %v1183, %v1191
          %v1193 = vadd.f32 %v1188, %v1192
          %v1194 = vlog2.pop %v1193
          %v1195 = vmul.f32 %v1194, 0.6931472
          %v1196 = vadd.f32 %v1185, %v1195
          %v1197 = vsub.f32 %v1139, %v1196
          %v1198 = vmul.f32 %v1196, 256.0
          %v1199 = vsub.f32 %v1184, %v1198
          %v1200 = vadd.f32 %v1197, %v1199
          %v1201 = vsub.f32 0.0, %v1197
          %v1202 = vmul.f32 %v1201, 0.9
          %v1203 = vsub.f32 0.0, %v1200
          %v1204 = vmul.f32 %v1203, %v1162
          %v1205 = vmul.f32 %v1204, 0.1
          %v1206 = vadd.f32 %v1202, %v1205
          %vm1207 = vcmp.ge.f32.partialorder %v1139, %v1182
          %v1208 = vsel %vm1207, 1, 0
          %v1209 = vcvt.s32.f32 %v1208
          %v1210 = vsel %vm1056, %v1206, 0.0
          %1211 = vadd.xlane.f32.xlu0 %v1210
          %v1212 = vpop.xlane.xlu0 %1211
          %v1213 = vrot.slane %v1212, 4
          %v1214 = vadd.f32 %v1212, %v1213
          %v1215 = vrot.slane %v1214, 2
          %v1216 = vadd.f32 %v1214, %v1215
          %v1217 = vrot.slane %v1216, 1
          %v1218 = vadd.f32 %v1216, %v1217
          %s1219 = vtos %v1218
          %v1220 = vrcp.pop 4.0
          %s1221 = vtos %v1220
          %s1222 = smul.f32 %s1219, %s1221
          %v1223 = vmul.f32 %v1168, %v1209
          %v1224 = vsel %vm1056, %v1223, 0.0
          %1225 = vadd.xlane.f32.xlu0 %v1224
          %v1226 = vpop.xlane.xlu0 %1225
          %v1227 = vrot.slane %v1226, 4
          %v1228 = vadd.f32 %v1226, %v1227
          %v1229 = vrot.slane %v1228, 2
          %v1230 = vadd.f32 %v1228, %v1229
          %v1231 = vrot.slane %v1230, 1
          %v1232 = vadd.f32 %v1230, %v1231
          %s1233 = vtos %v1232
          %v1234 = vsub.f32 %v1134, %v1139
          %v1235 = vsub.f32 0.0, %v1234
          %v1236 = vadd.f32 %v1235, 2.0
          %v1237 = vmax.f32 %v1236, 0.0
          %v1238 = vld [vmem:[#allocation11] sm:$0xf]
          %v1239 = vadd.f32 %v1237, %v1238
          %v1240 = vsel %vm1056, %v1239, 0.0
          %1241 = vadd.xlane.f32.xlu0 %v1240
          %v1242 = vpop.xlane.xlu0 %1241
          %v1243 = vrot.slane %v1242, 4
          %v1244 = vadd.f32 %v1242, %v1243
          %v1245 = vrot.slane %v1244, 2
          %v1246 = vadd.f32 %v1244, %v1245
          %v1247 = vrot.slane %v1246, 1
          %v1248 = vadd.f32 %v1246, %v1247
          %s1249 = vtos %v1248
          %v1250 = vrcp.pop 1028.0
          %s1251 = vtos %v1250
          %s1252 = smul.f32 %s1249, %s1251
          %v1253 = vmul.f32 %v1239, %v1223
          %v1254 = vsel %vm1056, %v1253, 0.0
          %1255 = vadd.xlane.f32.xlu0 %v1254
          %v1256 = vpop.xlane.xlu0 %1255
          %v1257 = vrot.slane %v1256, 4
          %v1258 = vadd.f32 %v1256, %v1257
          %v1259 = vrot.slane %v1258, 2
          %v1260 = vadd.f32 %v1258, %v1259
          %v1261 = vrot.slane %v1260, 1
          %v1262 = vadd.f32 %v1260, %v1261
          %s1263 = vtos %v1262
          %s1264 = smul.f32 %s1233, 257.0
          %s1265 = smax.f32 %s1264, 1.0
          %v1266 = vstv %s1265
          %v1267 = vrcp.pop %v1266
          %s1268 = vtos %v1267
          %s1269 = smul.f32 %s1263, %s1268
          %p1270 = scmp.gt.f32.partialorder %s1233, 0.0
          %s1271 = scalar_select %p1270, %s1269, %s1252
          %s1272 = smul.f32 %s1181, 0.8
          %s1273 = smul.f32 %s1222, 0.2
          %s1274 = sadd.f32 %s1272, %s1273
          %s1275 = sadd.f32 %s1274, %s1271
          %v1276 = vmul.f32 %v1134, 0.8
          %v1277 = vmul.f32 %v1139, 0.2
          %v1278 = vadd.f32 %v1276, %v1277
          %v1279 = vld [vmem:[#allocation10] sm:$0xf]
          %vm1280 = vcmp.ge.f32.partialorder %v1278, %v1279
          %v1281 = vsel %vm1280, 1, 0
          %v1282 = vcvt.s32.f32 %v1281
          %v1283 = vsel %vm1056, %v1282, 0.0
          %1284 = vadd.xlane.f32.xlu0 %v1283
          %v1285 = vpop.xlane.xlu0 %1284
          %v1286 = vrot.slane %v1285, 4
          %v1287 = vadd.f32 %v1285, %v1286
          %v1288 = vrot.slane %v1287, 2
          %v1289 = vadd.f32 %v1287, %v1288
          %v1290 = vrot.slane %v1289, 1
          %v1291 = vadd.f32 %v1289, %v1290
          %s1292 = vtos %v1291
          %v1293 = vrcp.pop 4.0
          %s1294 = vtos %v1293
          %s1295 = smul.f32 %s1292, %s1294
          %s1296 = smul.f32 %s1295, 100.0
          %v1297 = vsel %vm1033, %v1127, 0.0
          %v1298 = vrot.slane %v1297, 4
          %v1299 = vadd.f32 %v1297, %v1298
          %v1300 = vrot.slane %v1299, 2
          %v1301 = vadd.f32 %v1299, %v1300
          %v1302 = vrot.slane %v1301, 1
          %v1303 = vadd.f32 %v1301, %v1302
          %v1304 = vrcp.pop 4.0
          %v1305 = vmul.f32 %v1303, %v1304
          %v1306 = vsub.f32 %v1127, %v1305
          %v1307 = vmul.f32 %v1306, %v1306
          %v1308 = vsel %vm1033, %v1307, 0.0
          %v1309 = vrot.slane %v1308, 4
          %v1310 = vadd.f32 %v1308, %v1309
          %v1311 = vrot.slane %v1310, 2
          %v1312 = vadd.f32 %v1310, %v1311
          %v1313 = vrot.slane %v1312, 1
          %v1314 = vadd.f32 %v1312, %v1313
          %v1315 = vrcp.pop 3.0
          %v1316 = vmul.f32 %v1314, %v1315
          %v1317 = vrsqrt.pop %v1316
          %v1318 = vmul.f32 %v1316, %v1317
          %vm1319 = vcmp.eq.f32.partialorder %v1316, inf
          %v1320 = vsel %vm1319, %v1316, %v1318
          %vm1321 = vcmp.eq.f32.partialorder %v1316, 0.0
          %v1322 = vand.u32 %v1316, 2147483648
          %v1323 = vsel %vm1321, %v1322, %v1320
          %vm1324 = vcmask 1040384
          %v1325 = vsel %vm1324, %v1323, 0.0
          %1326 = vadd.xlane.f32.xlu0 %v1325
          %v1327 = vpop.xlane.xlu0 %1326
          %v1328 = vrot.slane %v1327, 4
          %v1329 = vadd.f32 %v1327, %v1328
          %v1330 = vrot.slane %v1329, 2
          %v1331 = vadd.f32 %v1329, %v1330
          %v1332 = vrot.slane %v1331, 1
          %v1333 = vadd.f32 %v1331, %v1332
          %s1334 = vtos %v1333
          %v1335 = vrcp.pop 128.0
          %s1336 = vtos %v1335
          %s1337 = smul.f32 %s1334, %s1336
          %v1338 = vsel %vm1033, %v1129, 0.0
          %v1339 = vrot.slane %v1338, 4
          %v1340 = vadd.f32 %v1338, %v1339
          %v1341 = vrot.slane %v1340, 2
          %v1342 = vadd.f32 %v1340, %v1341
          %v1343 = vrot.slane %v1342, 1
          %v1344 = vadd.f32 %v1342, %v1343
          %v1345 = vmul.f32 %v1344, %v1304
          %v1346 = vsub.f32 %v1129, %v1345
          %v1347 = vmul.f32 %v1346, %v1346
          %v1348 = vsel %vm1033, %v1347, 0.0
          %v1349 = vrot.slane %v1348, 4
          %v1350 = vadd.f32 %v1348, %v1349
          %v1351 = vrot.slane %v1350, 2
          %v1352 = vadd.f32 %v1350, %v1351
          %v1353 = vrot.slane %v1352, 1
          %v1354 = vadd.f32 %v1352, %v1353
          %v1355 = vmul.f32 %v1354, %v1315
          %v1356 = vrsqrt.pop %v1355
          %v1357 = vmul.f32 %v1355, %v1356
          %vm1358 = vcmp.eq.f32.partialorder %v1355, inf
          %v1359 = vsel %vm1358, %v1355, %v1357
          %vm1360 = vcmp.eq.f32.partialorder %v1355, 0.0
          %v1361 = vand.u32 %v1355, 2147483648
          %v1362 = vsel %vm1360, %v1361, %v1359
          %v1363 = vsel %vm1324, %v1362, 0.0
          %1364 = vadd.xlane.f32.xlu0 %v1363
          %v1365 = vpop.xlane.xlu0 %1364
          %v1366 = vrot.slane %v1365, 4
          %v1367 = vadd.f32 %v1365, %v1366
          %v1368 = vrot.slane %v1367, 2
          %v1369 = vadd.f32 %v1367, %v1368
          %v1370 = vrot.slane %v1369, 1
          %v1371 = vadd.f32 %v1369, %v1370
          %s1372 = vtos %v1371
          %v1373 = vrcp.pop 128.0
          %s1374 = vtos %v1373
          %s1375 = smul.f32 %s1372, %s1374
          %v1376 = vsel %vm1033, %v1128, 0.0
          %v1377 = vrot.slane %v1376, 4
          %v1378 = vadd.f32 %v1376, %v1377
          %v1379 = vrot.slane %v1378, 2
          %v1380 = vadd.f32 %v1378, %v1379
          %v1381 = vrot.slane %v1380, 1
          %v1382 = vadd.f32 %v1380, %v1381
          %v1383 = vmul.f32 %v1382, %v1304
          %v1384 = vsub.f32 %v1128, %v1383
          %v1385 = vmul.f32 %v1384, %v1384
          %v1386 = vsel %vm1033, %v1385, 0.0
          %v1387 = vrot.slane %v1386, 4
          %v1388 = vadd.f32 %v1386, %v1387
          %v1389 = vrot.slane %v1388, 2
          %v1390 = vadd.f32 %v1388, %v1389
          %v1391 = vrot.slane %v1390, 1
          %v1392 = vadd.f32 %v1390, %v1391
          %v1393 = vmul.f32 %v1392, %v1315
          %v1394 = vrsqrt.pop %v1393
          %v1395 = vmul.f32 %v1393, %v1394
          %vm1396 = vcmp.eq.f32.partialorder %v1393, inf
          %v1397 = vsel %vm1396, %v1393, %v1395
          %vm1398 = vcmp.eq.f32.partialorder %v1393, 0.0
          %v1399 = vand.u32 %v1393, 2147483648
          %v1400 = vsel %vm1398, %v1399, %v1397
          %v1401 = vsel %vm1324, %v1400, 0.0
          %1402 = vadd.xlane.f32.xlu0 %v1401
          %v1403 = vpop.xlane.xlu0 %1402
          %v1404 = vrot.slane %v1403, 4
          %v1405 = vadd.f32 %v1403, %v1404
          %v1406 = vrot.slane %v1405, 2
          %v1407 = vadd.f32 %v1405, %v1406
          %v1408 = vrot.slane %v1407, 1
          %v1409 = vadd.f32 %v1407, %v1408
          %s1410 = vtos %v1409
          %v1411 = vrcp.pop 128.0
          %s1412 = vtos %v1411
          %s1413 = smul.f32 %s1410, %s1412
          %v1414 = vlaneseq
          %v1415 = vand.u32 %v1414, 127
          %vm1416 = vcmp.eq.s32.totalorder %v1415, 0
          %v1417 = vsel %vm1416, 1, 0
          %v1418 = vcvt.s32.f32 %v1417
          %v1419 = vstv %s1275
          %v1420 = vmul.f32 %v1418, %v1419
          %v1421 = vadd.f32 %v1420, 0.0
          %vm1422 = vcmp.eq.s32.totalorder %v1415, 1
          %v1423 = vsel %vm1422, 1, 0
          %v1424 = vcvt.s32.f32 %v1423
          %v1425 = vstv %s1181
          %v1426 = vmul.f32 %v1424, %v1425
          %v1427 = vadd.f32 %v1421, %v1426
          %vm1428 = vcmp.eq.s32.totalorder %v1415, 2
          %v1429 = vsel %vm1428, 1, 0
          %v1430 = vcvt.s32.f32 %v1429
          %v1431 = vstv %s1222
          %v1432 = vmul.f32 %v1430, %v1431
          %v1433 = vadd.f32 %v1427, %v1432
          %vm1434 = vcmp.eq.s32.totalorder %v1415, 3
          %v1435 = vsel %vm1434, 1, 0
          %v1436 = vcvt.s32.f32 %v1435
          %v1437 = vstv %s1271
          %v1438 = vmul.f32 %v1436, %v1437
          %v1439 = vadd.f32 %v1433, %v1438
          %vm1440 = vcmp.eq.s32.totalorder %v1415, 4
          %v1441 = vsel %vm1440, 1, 0
          %v1442 = vcvt.s32.f32 %v1441
          %v1443 = vstv %s1296
          %v1444 = vmul.f32 %v1442, %v1443
          %v1445 = vadd.f32 %v1439, %v1444
          %vm1446 = vcmp.eq.s32.totalorder %v1415, 5
          %v1447 = vsel %vm1446, 1, 0
          %v1448 = vcvt.s32.f32 %v1447
          %v1449 = vstv %s1337
          %v1450 = vmul.f32 %v1448, %v1449
          %v1451 = vadd.f32 %v1445, %v1450
          %vm1452 = vcmp.eq.s32.totalorder %v1415, 6
          %v1453 = vsel %vm1452, 1, 0
          %v1454 = vcvt.s32.f32 %v1453
          %v1455 = vstv %s1375
          %v1456 = vmul.f32 %v1454, %v1455
          %v1457 = vadd.f32 %v1451, %v1456
          %vm1458 = vcmp.eq.s32.totalorder %v1415, 7
          %v1459 = vsel %vm1458, 1, 0
          %v1460 = vcvt.s32.f32 %v1459
          %v1461 = vstv %s1413
          %v1462 = vmul.f32 %v1460, %v1461
          %v1463 = vadd.f32 %v1457, %v1462
          %1464 = vst [vmem:[#allocation18] sm:$0x1] %v1463
        $region72: #{tpu_custom_call.1} parent=51 // pred_fallthru
          _
        // Predicated region
        $region73: #{tpu_custom_call.1} parent=51 // pred_check
          %p1465 = pneg %p208
        $region74: #{tpu_custom_call.1} parent=51 // pred_check_branch
          %1467 = sbr.rel (%p1465) target = $region76
        $region75: #{tpu_custom_call.1} parent=51 // pred_region
          %s1469 = ssub.s32 16, 16
          %1470 = vsyncadd [#allocation14], %s1469
          %s1472 = sshll.u32 [#allocation18], 4
          %s1473 = int_to_ptr.vmem [resolvable:$true] %s1472
          %1475 = dma.vmem_to_hbm [thread:$0]  %s1473, 16, %s8, [#allocation14]
        $region76: #{tpu_custom_call.1} parent=51 // pred_fallthru
          _
        // Predicated region
        $region77: #{tpu_custom_call.1} parent=51 // pred_check
          %p1476 = pneg %p208
        $region78: #{tpu_custom_call.1} parent=51 // pred_check_branch
          %1478 = sbr.rel (%p1476) target = $region80
        $region79: #{tpu_custom_call.1} parent=51 // pred_region
          %1479 = dma.done [#allocation14], 16
        $region80: #{tpu_custom_call.1} parent=51 // pred_fallthru
          _
      $region52: #{tpu_custom_call.1} parent=5 // pred_fallthru
        _
      %p1480 = scmp.le.s32.totalorder 2, %s17
      // Predicated region
      $region81: #{tpu_custom_call.1} parent=5 // pred_check
        %p1481 = pneg %p1480
      $region82: #{tpu_custom_call.1} parent=5 // pred_check_branch
        %1483 = sbr.rel (%p1481) target = $region84
      $region83: #{tpu_custom_call.1} parent=5 // pred_region
        %s1484 = ssub.s32 %s17, 2
      $region84: #{tpu_custom_call.1} parent=5 // pred_fallthru
        _
    $region6: #{tpu_custom_call.1} parent=1 // loop_footer
      %s21 = sadd.s32 1, %s17
    $region7: #{tpu_custom_call.1} parent=1 // loop_footer_branch
      %16 = sbr.rel target = $region3
    $region8: #{tpu_custom_call.1} parent=1 // loop_exit
      _
    %1485 = vsyncpa [#allocation13], 1
    %s1486 = scalar_lea.sflag [#allocation13], 1
    %1487 = vsyncpa %s1486, 1
    %1488 = vsyncpa [#allocation16], 1
    %1489 = vsyncpa [#allocation14], 1
    %s1490 = scalar_lea.sflag [#allocation14], 1
    %1491 = vsyncpa %s1490, 1

</llo_original>
